<compile_context>
chip_gen: v7x
topology: tpu7x:2x2x1
jax: 0.10.0
libtpu: 0.0.40
codegen_flags: <defaults>
</compile_context>

<pallas_src>
import functools

import jax
import jax.numpy as jnp
from jax import lax
from jax.experimental import pallas as pl
from jax.experimental.pallas import tpu as pltpu


def _transformer_kernel(heads, b_tile, seq_real, seq_pad, causal, ff_chunks,
                        acc_in_out,
                        x_ref,
                        ln1g_ref, ln1b_ref,
                        wqkv_ref, bqkv_ref,
                        wo_ref, bo_ref,
                        ln2g_ref, ln2b_ref,
                        wfc_ref, bfc_ref,
                        wproj_ref, bproj_ref,
                        o_ref,
                        *scratch):
    """One (batch_tile, layer) grid step of the residual-attention stack."""
    layer = pl.program_id(1)
    n_layers = pl.num_programs(1)

    L = seq_pad
    M, D = o_ref.shape                       # M = b_tile * seq_pad
    hd = D // heads
    fc = (4 * D) // ff_chunks
    bf16 = jnp.bfloat16

    attn_ref = scratch[0]                    # (M, D) bf16 head-output buffer
    # Residual stream: resident output block (f32) or a f32 scratch otherwise.
    xs_ref = o_ref if acc_in_out else scratch[1]

    # Load the batch tile into the resident residual stream at layer 0.
    @pl.when(layer == 0)
    def _():
        xs_ref[...] = x_ref[...].astype(xs_ref.dtype)

    def layernorm(v, g, b):                  # eps = 1e-5 (torch.nn.LayerNorm)
        mu = jnp.mean(v, axis=-1, keepdims=True)
        var = jnp.mean(jnp.square(v - mu), axis=-1, keepdims=True)
        return (v - mu) * lax.rsqrt(var + 1e-5) * g + b

    x = xs_ref[...].astype(jnp.float32)      # (M, D)

    # ---- self attention (nn.MultiheadAttention, q=k=v) ----
    h = layernorm(x, ln1g_ref[0], ln1b_ref[0]).astype(bf16)
    # 1/sqrt(hd) is pre-folded into the Q columns of wqkv / bqkv.
    qkv = jnp.dot(h, wqkv_ref[0], preferred_element_type=jnp.float32) + bqkv_ref[0]

    # Causal + key-padding mask, generated in-kernel (no (L, L) DMA) and
    # hoisted / pre-broadcast once outside the head loop.
    need_mask = causal or (seq_pad != seq_real)
    if need_mask:
        row = lax.broadcasted_iota(jnp.int32, (L, L), 0)
        col = lax.broadcasted_iota(jnp.int32, (L, L), 1)
        bad = col >= seq_real
        if causal:
            bad = bad | (col > row)
        neg = jnp.broadcast_to(
            jnp.where(bad, -1e30, 0.0).astype(jnp.float32)[None],
            (b_tile, L, L))

    # Per head: QK^T / softmax / PV batched over the b_tile sequences; the
    # head output is stored into its lane slice of the attention buffer so
    # the output projection below is a single full-K matmul.
    for hi in range(heads):
        c0 = hi * hd
        qh = qkv[:, c0:c0 + hd].reshape(b_tile, L, hd).astype(bf16)
        kh = qkv[:, D + c0:D + c0 + hd].reshape(b_tile, L, hd).astype(bf16)
        vh = qkv[:, 2 * D + c0:2 * D + c0 + hd].reshape(b_tile, L, hd).astype(bf16)
        s = jnp.einsum('bqd,bkd->bqk', qh, kh,
                       preferred_element_type=jnp.float32)        # (b, L, L)
        if need_mask:
            s = s + neg
        m = jnp.max(s, axis=-1, keepdims=True)
        p = jnp.exp(s - m)
        p = p * pl.reciprocal(jnp.sum(p, axis=-1, keepdims=True), approx=True)
        pv = jnp.einsum('bqk,bkd->bqd', p.astype(bf16), vh,
                        preferred_element_type=jnp.float32)       # (b, L, hd)
        attn_ref[:, c0:c0 + hd] = pv.reshape(M, hd).astype(bf16)

    attn_out = (jnp.dot(attn_ref[...], wo_ref[0],
                        preferred_element_type=jnp.float32) + bo_ref[0])
    x = x + attn_out                          # residual 1 (DropPath(0) == Id)
    xs_ref[...] = x.astype(xs_ref.dtype)

    # ---- MLP: c_fc -> QuickGELU -> c_proj, chunked over the 4D hidden dim ----
    h2 = layernorm(x, ln2g_ref[0], ln2b_ref[0]).astype(bf16)
    wfc, bfc, wproj = wfc_ref[0], bfc_ref[0], wproj_ref[0]
    ff_out = jnp.zeros((M, D), jnp.float32)
    for c in range(ff_chunks):
        f0 = c * fc
        g = (jnp.dot(h2, wfc[:, f0:f0 + fc],
                     preferred_element_type=jnp.float32) + bfc[:, f0:f0 + fc])
        g = g * jax.nn.sigmoid(1.702 * g)     # QuickGELU (f32)
        ff_out = ff_out + jnp.dot(g.astype(bf16), wproj[f0:f0 + fc, :],
                                  preferred_element_type=jnp.float32)
    x = x + ff_out + bproj_ref[0]             # residual 2
    xs_ref[...] = x.astype(xs_ref.dtype)

    if not acc_in_out:
        @pl.when(layer == n_layers - 1)
        def _():
            o_ref[...] = xs_ref[...].astype(o_ref.dtype)


def _ff_chunks(D):
    """Number of <=2048-lane chunks of the 4*D MLP hidden dim."""
    F = 4 * D
    if F <= 2048:
        return 1
    for c in (2048, 1024, 512):
        if F % c == 0:
            return F // c
    return 1


def _vmem_limit_bytes():
    try:
        phys = int(pltpu.get_tpu_info().vmem_capacity_bytes)
    except Exception:
        phys = 64 * 1024 * 1024          # assume the smallest (v7x) if unknown
    # ~100 MiB on 128-MiB parts (v5e/v6e), ~48 MiB on 64-MiB parts (v7x).
    return min(phys - 16 * 1024 * 1024, 100 * 1024 * 1024)


def _choose_b_tile(N, L_pad, D, vmem_limit):
    """Largest divisor of N that (a) keeps >= 2 batch tiles when N > 1 (so both
    TensorCores of a dual-TC chip get work) and (b) fits the VMEM row budget."""
    weight_bytes = 48 * D * D                    # double-buffered bf16 weights
    per_row = 56 * D                             # f32 blocks + bf16/f32 temps
    avail = max(0, int(vmem_limit * 0.7) - weight_bytes)
    target_rows = max(L_pad, min(avail // per_row, 1024))
    best = 1
    for d in range(1, N + 1):
        if N % d:
            continue
        if N > 1 and N // d < 2:                 # keep grid axis 0 >= 2 tiles
            continue
        if d * L_pad <= target_rows:
            best = d
    return best


def transformer_forward(x, params, heads, *, causal_mask=True, b_tile=None):
    """x: (L, N, D) -> (L, N, D); applies the whole stacked-weight layer stack."""
    L, N, D = x.shape
    layers = params['wqkv'].shape[0]
    assert D % heads == 0, "width must be divisible by heads"

    # Pad the sequence to a sublane multiple so every activation block obeys
    # the (8, 128) tiling rule; padded key columns are masked in-kernel and
    # padded query rows are sliced off below.
    L_pad = -(-L // 8) * 8
    if L_pad != L:
        x = jnp.concatenate([x, jnp.zeros((L_pad - L, N, D), x.dtype)], axis=0)

    vmem_limit = _vmem_limit_bytes()
    if b_tile is None:
        b_tile = _choose_b_tile(N, L_pad, D, vmem_limit)
    assert N % b_tile == 0, "batch must be divisible by b_tile"

    # (L_pad, N, D) -> (N*L_pad, D): lane-dense, matmul-friendly layout.
    x2d = jnp.transpose(x, (1, 0, 2)).reshape(N * L_pad, D)

    M = b_tile * L_pad
    ff_chunks = _ff_chunks(D)
    # Accumulate the residual stream directly in the resident output block
    # when the output dtype is f32 (saves a full f32 scratch + final copy).
    acc_in_out = x.dtype == jnp.float32

    kernel = functools.partial(_transformer_kernel, heads, b_tile, L, L_pad,
                               causal_mask, ff_chunks, acc_in_out)

    def wspec(shape):
        # Stacked per-layer parameter, streamed (double-buffered) along the
        # layer grid axis so layer l+1 weight DMA overlaps layer l compute.
        return pl.BlockSpec((1,) + shape, lambda b, l: (l,) + (0,) * len(shape))

    scratch_shapes = [pltpu.VMEM((M, D), jnp.bfloat16)]      # attention buffer
    if not acc_in_out:
        scratch_shapes.append(pltpu.VMEM((M, D), jnp.float32))

    out2d = pl.pallas_call(
        kernel,
        out_shape=jax.ShapeDtypeStruct((N * L_pad, D), x.dtype),
        grid_spec=pltpu.PrefetchScalarGridSpec(
            num_scalar_prefetch=0,
            grid=(N // b_tile, layers),
            in_specs=[
                pl.BlockSpec((M, D), lambda b, l: (b, 0)),     # x
                wspec((1, D)), wspec((1, D)),                  # ln_1 g/b
                wspec((D, 3 * D)), wspec((1, 3 * D)),          # in_proj W^T, b
                wspec((D, D)), wspec((1, D)),                  # out_proj W^T, b
                wspec((1, D)), wspec((1, D)),                  # ln_2 g/b
                wspec((D, 4 * D)), wspec((1, 4 * D)),          # c_fc W^T, b
                wspec((4 * D, D)), wspec((1, D)),              # c_proj W^T, b
            ],
            out_specs=pl.BlockSpec((M, D), lambda b, l: (b, 0)),
            scratch_shapes=scratch_shapes,
        ),
        compiler_params=pltpu.CompilerParams(
            dimension_semantics=("parallel", "arbitrary"),
            vmem_limit_bytes=vmem_limit),
    )(x2d,
      params['ln1_g'], params['ln1_b'], params['wqkv'], params['bqkv'],
      params['wo'], params['bo'],
      params['ln2_g'], params['ln2_b'], params['wfc'], params['bfc'],
      params['wproj'], params['bproj'])

    out = out2d.reshape(N, L_pad, D)[:, :L, :]
    return jnp.transpose(out, (1, 0, 2))


def init_params(key, width, layers, heads):
    """Stacked per-layer parameters; matmul weights stored in bf16.

    The 1/sqrt(head_dim) attention scale is folded into the Q columns of
    wqkv/bqkv, so neither the kernel nor the reference applies it again."""
    D = width
    hd = D // heads
    scale = 1.0 / float(hd) ** 0.5
    names = ('ln1_g', 'ln1_b', 'wqkv', 'bqkv', 'wo', 'bo',
             'ln2_g', 'ln2_b', 'wfc', 'bfc', 'wproj', 'bproj')
    acc = {n: [] for n in names}
    for i in range(layers):
        ks = jax.random.split(jax.random.fold_in(key, i), 8)
        wqkv = 0.02 * jax.random.normal(ks[0], (D, 3 * D), jnp.float32)
        bqkv = 0.02 * jax.random.normal(ks[1], (1, 3 * D), jnp.float32)
        wqkv = wqkv.at[:, :D].multiply(scale)        # fold attention scale
        bqkv = bqkv.at[:, :D].multiply(scale)
        acc['ln1_g'].append(jnp.ones((1, D), jnp.float32))
        acc['ln1_b'].append(jnp.zeros((1, D), jnp.float32))
        acc['wqkv'].append(wqkv)
        acc['bqkv'].append(bqkv)
        acc['wo'].append(0.02 * jax.random.normal(ks[2], (D, D), jnp.float32))
        acc['bo'].append(0.02 * jax.random.normal(ks[3], (1, D), jnp.float32))
        acc['ln2_g'].append(jnp.ones((1, D), jnp.float32))
        acc['ln2_b'].append(jnp.zeros((1, D), jnp.float32))
        acc['wfc'].append(0.02 * jax.random.normal(ks[4], (D, 4 * D), jnp.float32))
        acc['bfc'].append(0.02 * jax.random.normal(ks[5], (1, 4 * D), jnp.float32))
        acc['wproj'].append(0.02 * jax.random.normal(ks[6], (4 * D, D), jnp.float32))
        acc['bproj'].append(0.02 * jax.random.normal(ks[7], (1, D), jnp.float32))
    params = {n: jnp.stack(v) for n, v in acc.items()}
    for n in ('wqkv', 'wo', 'wfc', 'wproj'):      # bf16 MXU fast path
        params[n] = params[n].astype(jnp.bfloat16)
    return params


def reference_forward(x, params, heads, causal=True):
    """Pure-JAX f32 reference of the PyTorch forward (same weights).

    Note: the attention scale is pre-folded into the stored Q weights (see
    init_params), so it is not applied again here."""
    L, N, D = x.shape
    hd = D // heads
    layers = params['wqkv'].shape[0]
    mask = (jnp.triu(jnp.full((L, L), -jnp.inf, jnp.float32), k=1)
            if causal else jnp.zeros((L, L), jnp.float32))

    def ln(v, g, b):
        mu = v.mean(-1, keepdims=True)
        var = ((v - mu) ** 2).mean(-1, keepdims=True)
        return (v - mu) / jnp.sqrt(var + 1e-5) * g + b

    f32 = lambda a: a.astype(jnp.float32)
    xb = jnp.transpose(x, (1, 0, 2))
    for i in range(layers):
        wqkv, bqkv = f32(params['wqkv'][i]), params['bqkv'][i]
        wo, bo = f32(params['wo'][i]), params['bo'][i]
        wfc, bfc = f32(params['wfc'][i]), params['bfc'][i]
        wproj, bproj = f32(params['wproj'][i]), params['bproj'][i]
        h = ln(xb, params['ln1_g'][i], params['ln1_b'][i])
        qkv = h @ wqkv + bqkv
        q, k, v = jnp.split(qkv, 3, axis=-1)
        q = q.reshape(N, L, heads, hd).transpose(0, 2, 1, 3)
        k = k.reshape(N, L, heads, hd).transpose(0, 2, 1, 3)
        v = v.reshape(N, L, heads, hd).transpose(0, 2, 1, 3)
        s = jnp.einsum('nhqd,nhkd->nhqk', q, k) + mask
        a = jax.nn.softmax(s, axis=-1)
        a = jnp.einsum('nhqk,nhkd->nhqd', a, v).transpose(0, 2, 1, 3).reshape(N, L, D)
        xb = xb + (a @ wo + bo)
        h2 = ln(xb, params['ln2_g'][i], params['ln2_b'][i])
        ff = h2 @ wfc + bfc
        ff = ff * jax.nn.sigmoid(1.702 * ff)
        xb = xb + (ff @ wproj + bproj)
    return jnp.transpose(xb, (1, 0, 2))


if __name__ == "__main__":
    L, N, D, H, LAYERS = 8, 2, 32, 4, 2      # seq, batch, width, heads, layers
    key = jax.random.PRNGKey(0)
    kx, kp = jax.random.split(key)

    x = jax.random.normal(kx, (L, N, D), jnp.float32)
    params = init_params(kp, D, LAYERS, H)

    out = transformer_forward(x, params, H, causal_mask=True)
    out = jax.block_until_ready(out)

    ref = reference_forward(x, params, H, causal=True)
    assert out.shape == (L, N, D)
    # bf16 matmul operands loosen the tolerance vs. the f32 reference.
    assert jnp.allclose(out, ref, atol=2e-2, rtol=2e-2), \
        f"kernel/reference mismatch: max abs err {jnp.max(jnp.abs(out - ref))}"
    print("KERNEL_OK")
</pallas_src>

<mosaic_0001>
module attributes {stable_mosaic.version = 11 : i64} {
  func.func @_transformer_kernel(%arg0: i32, %arg1: i32, %arg2: memref<8x32xf32, #tpu.memory_space<vmem>>, %arg3: memref<1x1x32xf32, #tpu.memory_space<vmem>>, %arg4: memref<1x1x32xf32, #tpu.memory_space<vmem>>, %arg5: memref<1x32x96xbf16, #tpu.memory_space<vmem>>, %arg6: memref<1x1x96xf32, #tpu.memory_space<vmem>>, %arg7: memref<1x32x32xbf16, #tpu.memory_space<vmem>>, %arg8: memref<1x1x32xf32, #tpu.memory_space<vmem>>, %arg9: memref<1x1x32xf32, #tpu.memory_space<vmem>>, %arg10: memref<1x1x32xf32, #tpu.memory_space<vmem>>, %arg11: memref<1x32x128xbf16, #tpu.memory_space<vmem>>, %arg12: memref<1x1x128xf32, #tpu.memory_space<vmem>>, %arg13: memref<1x128x32xbf16, #tpu.memory_space<vmem>>, %arg14: memref<1x1x32xf32, #tpu.memory_space<vmem>>, %arg15: memref<8x32xf32, #tpu.memory_space<vmem>>, %arg16: memref<8x32xbf16, #tpu.memory_space<vmem>>) attributes {dimension_semantics = [#tpu.dimension_semantics<parallel>, #tpu.dimension_semantics<arbitrary>], iteration_bounds = array<i64: 2, 2>, scalar_prefetch = 0 : i64, scratch_operands = 1 : i64, tpu.core_type = #tpu.core_type<tc>, window_params = [{transform_indices = @transform_0, window_bounds = array<i64: 8, 32>}, {transform_indices = @transform_1, window_bounds = array<i64: 1, 1, 32>}, {transform_indices = @transform_2, window_bounds = array<i64: 1, 1, 32>}, {transform_indices = @transform_3, window_bounds = array<i64: 1, 32, 96>}, {transform_indices = @transform_4, window_bounds = array<i64: 1, 1, 96>}, {transform_indices = @transform_5, window_bounds = array<i64: 1, 32, 32>}, {transform_indices = @transform_6, window_bounds = array<i64: 1, 1, 32>}, {transform_indices = @transform_7, window_bounds = array<i64: 1, 1, 32>}, {transform_indices = @transform_8, window_bounds = array<i64: 1, 1, 32>}, {transform_indices = @transform_9, window_bounds = array<i64: 1, 32, 128>}, {transform_indices = @transform_10, window_bounds = array<i64: 1, 1, 128>}, {transform_indices = @transform_11, window_bounds = array<i64: 1, 128, 32>}, {transform_indices = @transform_12, window_bounds = array<i64: 1, 1, 32>}, {transform_indices = @transform_13, window_bounds = array<i64: 8, 32>}]} {
    %c0_i32 = arith.constant 0 : i32
    %0 = arith.cmpi eq, %arg1, %c0_i32 : i32
    %1 = arith.extui %0 : i1 to i32
    %c0_i32_0 = arith.constant 0 : i32
    %2 = arith.cmpi ne, %1, %c0_i32_0 : i32
    scf.if %2 {
      %c0_83 = arith.constant 0 : index
      %c0_84 = arith.constant 0 : index
      %216 = vector.load %arg2[%c0_83, %c0_84] : memref<8x32xf32, #tpu.memory_space<vmem>>, vector<8x32xf32>
      %c0_85 = arith.constant 0 : index
      %c0_86 = arith.constant 0 : index
      %217 = vector.load %arg15[%c0_85, %c0_86] : memref<8x32xf32, #tpu.memory_space<vmem>>, vector<8x32xf32>
      tpu.vector_store %arg15[%c0_85, %c0_86], %216 {strides = array<i32>} : memref<8x32xf32, #tpu.memory_space<vmem>>, vector<8x32xf32>,
    } else {
    }
    %c0 = arith.constant 0 : index
    %c0_1 = arith.constant 0 : index
    %3 = vector.load %arg15[%c0, %c0_1] : memref<8x32xf32, #tpu.memory_space<vmem>>, vector<8x32xf32>
    %c0_2 = arith.constant 0 : index
    %c0_3 = arith.constant 0 : index
    %c0_4 = arith.constant 0 : index
    %4 = vector.load %arg3[%c0_2, %c0_3, %c0_4] : memref<1x1x32xf32, #tpu.memory_space<vmem>>, vector<1x1x32xf32>
    %5 = vector.shape_cast %4 : vector<1x1x32xf32> to vector<1x32xf32>
    %c0_5 = arith.constant 0 : index
    %c0_6 = arith.constant 0 : index
    %c0_7 = arith.constant 0 : index
    %6 = vector.load %arg4[%c0_5, %c0_6, %c0_7] : memref<1x1x32xf32, #tpu.memory_space<vmem>>, vector<1x1x32xf32>
    %7 = vector.shape_cast %6 : vector<1x1x32xf32> to vector<1x32xf32>
    %cst = arith.constant dense<0.000000e+00> : vector<8xf32>
    %8 = vector.multi_reduction <add>, %3, %cst [1] : vector<8x32xf32> to vector<8xf32>
    %9 = vector.shape_cast %8 : vector<8xf32> to vector<8x1xf32>
    %cst_8 = arith.constant 3.200000e+01 : f32
    %10 = vector.broadcast %cst_8 : f32 to vector<8x1xf32>
    %11 = arith.divf %9, %10 : vector<8x1xf32>
    %12 = vector.broadcast %11 : vector<8x1xf32> to vector<8x32xf32>
    %13 = arith.subf %3, %12 : vector<8x32xf32>
    %14 = arith.mulf %13, %13 : vector<8x32xf32>
    %cst_9 = arith.constant dense<0.000000e+00> : vector<8xf32>
    %15 = vector.multi_reduction <add>, %14, %cst_9 [1] : vector<8x32xf32> to vector<8xf32>
    %16 = vector.shape_cast %15 : vector<8xf32> to vector<8x1xf32>
    %cst_10 = arith.constant 3.200000e+01 : f32
    %17 = vector.broadcast %cst_10 : f32 to vector<8x1xf32>
    %18 = arith.divf %16, %17 : vector<8x1xf32>
    %19 = vector.broadcast %11 : vector<8x1xf32> to vector<8x32xf32>
    %20 = arith.subf %3, %19 : vector<8x32xf32>
    %cst_11 = arith.constant 9.99999974E-6 : f32
    %21 = vector.broadcast %cst_11 : f32 to vector<8x1xf32>
    %22 = arith.addf %18, %21 : vector<8x1xf32>
    %23 = math.rsqrt %22 : vector<8x1xf32>
    %24 = vector.broadcast %23 : vector<8x1xf32> to vector<8x32xf32>
    %25 = arith.mulf %20, %24 : vector<8x32xf32>
    %26 = vector.broadcast %5 : vector<1x32xf32> to vector<8x32xf32>
    %27 = arith.mulf %25, %26 : vector<8x32xf32>
    %28 = vector.broadcast %7 : vector<1x32xf32> to vector<8x32xf32>
    %29 = arith.addf %27, %28 : vector<8x32xf32>
    %30 = arith.truncf %29 : vector<8x32xf32> to vector<8x32xbf16>
    %c0_12 = arith.constant 0 : index
    %c0_13 = arith.constant 0 : index
    %c0_14 = arith.constant 0 : index
    %31 = vector.load %arg5[%c0_12, %c0_13, %c0_14] : memref<1x32x96xbf16, #tpu.memory_space<vmem>>, vector<1x32x96xbf16>
    %32 = vector.shape_cast %31 : vector<1x32x96xbf16> to vector<32x96xbf16>
    %cst_15 = arith.constant dense<0.000000e+00> : vector<8x96xf32>
    %33 = tpu.matmul %30, %32, %cst_15 {dimension_numbers = #tpu.dot_dimension_numbers<[1], [0], [0], [1], [0, 0, 1, 1], [], []>} : vector<8x32xbf16>, vector<32x96xbf16>, vector<8x96xf32> -> vector<8x96xf32>
    %c0_16 = arith.constant 0 : index
    %c0_17 = arith.constant 0 : index
    %c0_18 = arith.constant 0 : index
    %34 = vector.load %arg6[%c0_16, %c0_17, %c0_18] : memref<1x1x96xf32, #tpu.memory_space<vmem>>, vector<1x1x96xf32>
    %35 = vector.shape_cast %34 : vector<1x1x96xf32> to vector<1x96xf32>
    %36 = vector.broadcast %35 : vector<1x96xf32> to vector<8x96xf32>
    %37 = arith.addf %33, %36 : vector<8x96xf32>
    %38 = tpu.iota {dimensions = array<i32: 0>} : vector<8x8xi32>
    %39 = tpu.iota {dimensions = array<i32: 1>} : vector<8x8xi32>
    %c8_i32 = arith.constant 8 : i32
    %40 = vector.broadcast %c8_i32 : i32 to vector<8x8xi32>
    %41 = arith.cmpi sge, %39, %40 : vector<8x8xi32>
    %42 = arith.cmpi sgt, %39, %38 : vector<8x8xi32>
    %43 = arith.ori %41, %42 : vector<8x8xi1>
    %cst_19 = arith.constant -1.000000e+30 : f32
    %cst_20 = arith.constant 0.000000e+00 : f32
    %44 = vector.broadcast %cst_19 : f32 to vector<8x8xf32>
    %45 = vector.broadcast %cst_20 : f32 to vector<8x8xf32>
    %46 = arith.select %43, %44, %45 : vector<8x8xi1>, vector<8x8xf32>
    %47 = vector.shape_cast %46 : vector<8x8xf32> to vector<1x8x8xf32>
    %48 = vector.extract_strided_slice %37 {offsets = [0, 0], sizes = [8, 8], strides = [1, 1]} : vector<8x96xf32> to vector<8x8xf32>
    %49 = vector.shape_cast %48 : vector<8x8xf32> to vector<1x8x8xf32>
    %50 = arith.truncf %49 : vector<1x8x8xf32> to vector<1x8x8xbf16>
    %51 = vector.extract_strided_slice %37 {offsets = [0, 32], sizes = [8, 8], strides = [1, 1]} : vector<8x96xf32> to vector<8x8xf32>
    %52 = vector.shape_cast %51 : vector<8x8xf32> to vector<1x8x8xf32>
    %53 = arith.truncf %52 : vector<1x8x8xf32> to vector<1x8x8xbf16>
    %54 = vector.extract_strided_slice %37 {offsets = [0, 64], sizes = [8, 8], strides = [1, 1]} : vector<8x96xf32> to vector<8x8xf32>
    %55 = vector.shape_cast %54 : vector<8x8xf32> to vector<1x8x8xf32>
    %56 = arith.truncf %55 : vector<1x8x8xf32> to vector<1x8x8xbf16>
    "tpu.trace_start"() <{level = 10 : i32, message = "bqd,bkd->bqk"}> : () -> ()
    %cst_21 = arith.constant dense<0.000000e+00> : vector<1x8x8xf32>
    %57 = tpu.matmul %50, %53, %cst_21 {dimension_numbers = #tpu.dot_dimension_numbers<[2], [2], [1], [1], [0, 0, 0, 1, 1, 1], [0], [0]>} : vector<1x8x8xbf16>, vector<1x8x8xbf16>, vector<1x8x8xf32> -> vector<1x8x8xf32>
    "tpu.trace_stop"() : () -> ()
    %58 = arith.addf %57, %47 : vector<1x8x8xf32>
    %cst_22 = arith.constant dense<0xFF800000> : vector<1x8xf32>
    %59 = vector.multi_reduction <maximumf>, %58, %cst_22 [2] : vector<1x8x8xf32> to vector<1x8xf32>
    %60 = vector.shape_cast %59 : vector<1x8xf32> to vector<1x8x1xf32>
    %61 = vector.broadcast %60 : vector<1x8x1xf32> to vector<1x8x8xf32>
    %62 = arith.subf %58, %61 : vector<1x8x8xf32>
    %63 = math.exp %62 : vector<1x8x8xf32>
    %cst_23 = arith.constant dense<0.000000e+00> : vector<1x8xf32>
    %64 = vector.multi_reduction <add>, %63, %cst_23 [2] : vector<1x8x8xf32> to vector<1x8xf32>
    %65 = vector.shape_cast %64 : vector<1x8xf32> to vector<1x8x1xf32>
    %66 = tpu.reciprocal %65 {approx = true} : vector<1x8x1xf32> -> vector<1x8x1xf32>
    %67 = vector.broadcast %66 : vector<1x8x1xf32> to vector<1x8x8xf32>
    %68 = arith.mulf %63, %67 : vector<1x8x8xf32>
    %69 = arith.truncf %68 : vector<1x8x8xf32> to vector<1x8x8xbf16>
    "tpu.trace_start"() <{level = 10 : i32, message = "bqk,bkd->bqd"}> : () -> ()
    %cst_24 = arith.constant dense<0.000000e+00> : vector<1x8x8xf32>
    %70 = tpu.matmul %69, %56, %cst_24 {dimension_numbers = #tpu.dot_dimension_numbers<[2], [1], [1], [2], [0, 0, 0, 1, 1, 2], [0], [0]>} : vector<1x8x8xbf16>, vector<1x8x8xbf16>, vector<1x8x8xf32> -> vector<1x8x8xf32>
    "tpu.trace_stop"() : () -> ()
    %71 = vector.shape_cast %70 : vector<1x8x8xf32> to vector<8x8xf32>
    %72 = arith.truncf %71 : vector<8x8xf32> to vector<8x8xbf16>
    %c0_25 = arith.constant 0 : index
    %c0_26 = arith.constant 0 : index
    %73 = vector.load %arg16[%c0_25, %c0_26] : memref<8x32xbf16, #tpu.memory_space<vmem>>, vector<8x8xbf16>
    tpu.vector_store %arg16[%c0_25, %c0_26], %72 {strides = array<i32>} : memref<8x32xbf16, #tpu.memory_space<vmem>>, vector<8x8xbf16>,
    %74 = vector.extract_strided_slice %37 {offsets = [0, 8], sizes = [8, 8], strides = [1, 1]} : vector<8x96xf32> to vector<8x8xf32>
    %75 = vector.shape_cast %74 : vector<8x8xf32> to vector<1x8x8xf32>
    %76 = arith.truncf %75 : vector<1x8x8xf32> to vector<1x8x8xbf16>
    %77 = vector.extract_strided_slice %37 {offsets = [0, 40], sizes = [8, 8], strides = [1, 1]} : vector<8x96xf32> to vector<8x8xf32>
    %78 = vector.shape_cast %77 : vector<8x8xf32> to vector<1x8x8xf32>
    %79 = arith.truncf %78 : vector<1x8x8xf32> to vector<1x8x8xbf16>
    %80 = vector.extract_strided_slice %37 {offsets = [0, 72], sizes = [8, 8], strides = [1, 1]} : vector<8x96xf32> to vector<8x8xf32>
    %81 = vector.shape_cast %80 : vector<8x8xf32> to vector<1x8x8xf32>
    %82 = arith.truncf %81 : vector<1x8x8xf32> to vector<1x8x8xbf16>
    "tpu.trace_start"() <{level = 10 : i32, message = "bqd,bkd->bqk"}> : () -> ()
    %cst_27 = arith.constant dense<0.000000e+00> : vector<1x8x8xf32>
    %83 = tpu.matmul %76, %79, %cst_27 {dimension_numbers = #tpu.dot_dimension_numbers<[2], [2], [1], [1], [0, 0, 0, 1, 1, 1], [0], [0]>} : vector<1x8x8xbf16>, vector<1x8x8xbf16>, vector<1x8x8xf32> -> vector<1x8x8xf32>
    "tpu.trace_stop"() : () -> ()
    %84 = arith.addf %83, %47 : vector<1x8x8xf32>
    %cst_28 = arith.constant dense<0xFF800000> : vector<1x8xf32>
    %85 = vector.multi_reduction <maximumf>, %84, %cst_28 [2] : vector<1x8x8xf32> to vector<1x8xf32>
    %86 = vector.shape_cast %85 : vector<1x8xf32> to vector<1x8x1xf32>
    %87 = vector.broadcast %86 : vector<1x8x1xf32> to vector<1x8x8xf32>
    %88 = arith.subf %84, %87 : vector<1x8x8xf32>
    %89 = math.exp %88 : vector<1x8x8xf32>
    %cst_29 = arith.constant dense<0.000000e+00> : vector<1x8xf32>
    %90 = vector.multi_reduction <add>, %89, %cst_29 [2] : vector<1x8x8xf32> to vector<1x8xf32>
    %91 = vector.shape_cast %90 : vector<1x8xf32> to vector<1x8x1xf32>
    %92 = tpu.reciprocal %91 {approx = true} : vector<1x8x1xf32> -> vector<1x8x1xf32>
    %93 = vector.broadcast %92 : vector<1x8x1xf32> to vector<1x8x8xf32>
    %94 = arith.mulf %89, %93 : vector<1x8x8xf32>
    %95 = arith.truncf %94 : vector<1x8x8xf32> to vector<1x8x8xbf16>
    "tpu.trace_start"() <{level = 10 : i32, message = "bqk,bkd->bqd"}> : () -> ()
    %cst_30 = arith.constant dense<0.000000e+00> : vector<1x8x8xf32>
    %96 = tpu.matmul %95, %82, %cst_30 {dimension_numbers = #tpu.dot_dimension_numbers<[2], [1], [1], [2], [0, 0, 0, 1, 1, 2], [0], [0]>} : vector<1x8x8xbf16>, vector<1x8x8xbf16>, vector<1x8x8xf32> -> vector<1x8x8xf32>
    "tpu.trace_stop"() : () -> ()
    %97 = vector.shape_cast %96 : vector<1x8x8xf32> to vector<8x8xf32>
    %98 = arith.truncf %97 : vector<8x8xf32> to vector<8x8xbf16>
    %c0_31 = arith.constant 0 : index
    %c8 = arith.constant 8 : index
    %99 = vector.load %arg16[%c0_31, %c8] : memref<8x32xbf16, #tpu.memory_space<vmem>>, vector<8x8xbf16>
    tpu.vector_store %arg16[%c0_31, %c8], %98 {strides = array<i32>} : memref<8x32xbf16, #tpu.memory_space<vmem>>, vector<8x8xbf16>,
    %100 = vector.extract_strided_slice %37 {offsets = [0, 16], sizes = [8, 8], strides = [1, 1]} : vector<8x96xf32> to vector<8x8xf32>
    %101 = vector.shape_cast %100 : vector<8x8xf32> to vector<1x8x8xf32>
    %102 = arith.truncf %101 : vector<1x8x8xf32> to vector<1x8x8xbf16>
    %103 = vector.extract_strided_slice %37 {offsets = [0, 48], sizes = [8, 8], strides = [1, 1]} : vector<8x96xf32> to vector<8x8xf32>
    %104 = vector.shape_cast %103 : vector<8x8xf32> to vector<1x8x8xf32>
    %105 = arith.truncf %104 : vector<1x8x8xf32> to vector<1x8x8xbf16>
    %106 = vector.extract_strided_slice %37 {offsets = [0, 80], sizes = [8, 8], strides = [1, 1]} : vector<8x96xf32> to vector<8x8xf32>
    %107 = vector.shape_cast %106 : vector<8x8xf32> to vector<1x8x8xf32>
    %108 = arith.truncf %107 : vector<1x8x8xf32> to vector<1x8x8xbf16>
    "tpu.trace_start"() <{level = 10 : i32, message = "bqd,bkd->bqk"}> : () -> ()
    %cst_32 = arith.constant dense<0.000000e+00> : vector<1x8x8xf32>
    %109 = tpu.matmul %102, %105, %cst_32 {dimension_numbers = #tpu.dot_dimension_numbers<[2], [2], [1], [1], [0, 0, 0, 1, 1, 1], [0], [0]>} : vector<1x8x8xbf16>, vector<1x8x8xbf16>, vector<1x8x8xf32> -> vector<1x8x8xf32>
    "tpu.trace_stop"() : () -> ()
    %110 = arith.addf %109, %47 : vector<1x8x8xf32>
    %cst_33 = arith.constant dense<0xFF800000> : vector<1x8xf32>
    %111 = vector.multi_reduction <maximumf>, %110, %cst_33 [2] : vector<1x8x8xf32> to vector<1x8xf32>
    %112 = vector.shape_cast %111 : vector<1x8xf32> to vector<1x8x1xf32>
    %113 = vector.broadcast %112 : vector<1x8x1xf32> to vector<1x8x8xf32>
    %114 = arith.subf %110, %113 : vector<1x8x8xf32>
    %115 = math.exp %114 : vector<1x8x8xf32>
    %cst_34 = arith.constant dense<0.000000e+00> : vector<1x8xf32>
    %116 = vector.multi_reduction <add>, %115, %cst_34 [2] : vector<1x8x8xf32> to vector<1x8xf32>
    %117 = vector.shape_cast %116 : vector<1x8xf32> to vector<1x8x1xf32>
    %118 = tpu.reciprocal %117 {approx = true} : vector<1x8x1xf32> -> vector<1x8x1xf32>
    %119 = vector.broadcast %118 : vector<1x8x1xf32> to vector<1x8x8xf32>
    %120 = arith.mulf %115, %119 : vector<1x8x8xf32>
    %121 = arith.truncf %120 : vector<1x8x8xf32> to vector<1x8x8xbf16>
    "tpu.trace_start"() <{level = 10 : i32, message = "bqk,bkd->bqd"}> : () -> ()
    %cst_35 = arith.constant dense<0.000000e+00> : vector<1x8x8xf32>
    %122 = tpu.matmul %121, %108, %cst_35 {dimension_numbers = #tpu.dot_dimension_numbers<[2], [1], [1], [2], [0, 0, 0, 1, 1, 2], [0], [0]>} : vector<1x8x8xbf16>, vector<1x8x8xbf16>, vector<1x8x8xf32> -> vector<1x8x8xf32>
    "tpu.trace_stop"() : () -> ()
    %123 = vector.shape_cast %122 : vector<1x8x8xf32> to vector<8x8xf32>
    %124 = arith.truncf %123 : vector<8x8xf32> to vector<8x8xbf16>
    %c0_36 = arith.constant 0 : index
    %c16 = arith.constant 16 : index
    %125 = vector.load %arg16[%c0_36, %c16] : memref<8x32xbf16, #tpu.memory_space<vmem>>, vector<8x8xbf16>
    tpu.vector_store %arg16[%c0_36, %c16], %124 {strides = array<i32>} : memref<8x32xbf16, #tpu.memory_space<vmem>>, vector<8x8xbf16>,
    %126 = vector.extract_strided_slice %37 {offsets = [0, 24], sizes = [8, 8], strides = [1, 1]} : vector<8x96xf32> to vector<8x8xf32>
    %127 = vector.shape_cast %126 : vector<8x8xf32> to vector<1x8x8xf32>
    %128 = arith.truncf %127 : vector<1x8x8xf32> to vector<1x8x8xbf16>
    %129 = vector.extract_strided_slice %37 {offsets = [0, 56], sizes = [8, 8], strides = [1, 1]} : vector<8x96xf32> to vector<8x8xf32>
    %130 = vector.shape_cast %129 : vector<8x8xf32> to vector<1x8x8xf32>
    %131 = arith.truncf %130 : vector<1x8x8xf32> to vector<1x8x8xbf16>
    %132 = vector.extract_strided_slice %37 {offsets = [0, 88], sizes = [8, 8], strides = [1, 1]} : vector<8x96xf32> to vector<8x8xf32>
    %133 = vector.shape_cast %132 : vector<8x8xf32> to vector<1x8x8xf32>
    %134 = arith.truncf %133 : vector<1x8x8xf32> to vector<1x8x8xbf16>
    "tpu.trace_start"() <{level = 10 : i32, message = "bqd,bkd->bqk"}> : () -> ()
    %cst_37 = arith.constant dense<0.000000e+00> : vector<1x8x8xf32>
    %135 = tpu.matmul %128, %131, %cst_37 {dimension_numbers = #tpu.dot_dimension_numbers<[2], [2], [1], [1], [0, 0, 0, 1, 1, 1], [0], [0]>} : vector<1x8x8xbf16>, vector<1x8x8xbf16>, vector<1x8x8xf32> -> vector<1x8x8xf32>
    "tpu.trace_stop"() : () -> ()
    %136 = arith.addf %135, %47 : vector<1x8x8xf32>
    %cst_38 = arith.constant dense<0xFF800000> : vector<1x8xf32>
    %137 = vector.multi_reduction <maximumf>, %136, %cst_38 [2] : vector<1x8x8xf32> to vector<1x8xf32>
    %138 = vector.shape_cast %137 : vector<1x8xf32> to vector<1x8x1xf32>
    %139 = vector.broadcast %138 : vector<1x8x1xf32> to vector<1x8x8xf32>
    %140 = arith.subf %136, %139 : vector<1x8x8xf32>
    %141 = math.exp %140 : vector<1x8x8xf32>
    %cst_39 = arith.constant dense<0.000000e+00> : vector<1x8xf32>
    %142 = vector.multi_reduction <add>, %141, %cst_39 [2] : vector<1x8x8xf32> to vector<1x8xf32>
    %143 = vector.shape_cast %142 : vector<1x8xf32> to vector<1x8x1xf32>
    %144 = tpu.reciprocal %143 {approx = true} : vector<1x8x1xf32> -> vector<1x8x1xf32>
    %145 = vector.broadcast %144 : vector<1x8x1xf32> to vector<1x8x8xf32>
    %146 = arith.mulf %141, %145 : vector<1x8x8xf32>
    %147 = arith.truncf %146 : vector<1x8x8xf32> to vector<1x8x8xbf16>
    "tpu.trace_start"() <{level = 10 : i32, message = "bqk,bkd->bqd"}> : () -> ()
    %cst_40 = arith.constant dense<0.000000e+00> : vector<1x8x8xf32>
    %148 = tpu.matmul %147, %134, %cst_40 {dimension_numbers = #tpu.dot_dimension_numbers<[2], [1], [1], [2], [0, 0, 0, 1, 1, 2], [0], [0]>} : vector<1x8x8xbf16>, vector<1x8x8xbf16>, vector<1x8x8xf32> -> vector<1x8x8xf32>
    "tpu.trace_stop"() : () -> ()
    %149 = vector.shape_cast %148 : vector<1x8x8xf32> to vector<8x8xf32>
    %150 = arith.truncf %149 : vector<8x8xf32> to vector<8x8xbf16>
    %c0_41 = arith.constant 0 : index
    %c24 = arith.constant 24 : index
    %151 = vector.load %arg16[%c0_41, %c24] : memref<8x32xbf16, #tpu.memory_space<vmem>>, vector<8x8xbf16>
    tpu.vector_store %arg16[%c0_41, %c24], %150 {strides = array<i32>} : memref<8x32xbf16, #tpu.memory_space<vmem>>, vector<8x8xbf16>,
    %c0_42 = arith.constant 0 : index
    %c0_43 = arith.constant 0 : index
    %152 = vector.load %arg16[%c0_42, %c0_43] : memref<8x32xbf16, #tpu.memory_space<vmem>>, vector<8x32xbf16>
    %c0_44 = arith.constant 0 : index
    %c0_45 = arith.constant 0 : index
    %c0_46 = arith.constant 0 : index
    %153 = vector.load %arg7[%c0_44, %c0_45, %c0_46] : memref<1x32x32xbf16, #tpu.memory_space<vmem>>, vector<1x32x32xbf16>
    %154 = vector.shape_cast %153 : vector<1x32x32xbf16> to vector<32x32xbf16>
    %cst_47 = arith.constant dense<0.000000e+00> : vector<8x32xf32>
    %155 = tpu.matmul %152, %154, %cst_47 {dimension_numbers = #tpu.dot_dimension_numbers<[1], [0], [0], [1], [0, 0, 1, 1], [], []>} : vector<8x32xbf16>, vector<32x32xbf16>, vector<8x32xf32> -> vector<8x32xf32>
    %c0_48 = arith.constant 0 : index
    %c0_49 = arith.constant 0 : index
    %c0_50 = arith.constant 0 : index
    %156 = vector.load %arg8[%c0_48, %c0_49, %c0_50] : memref<1x1x32xf32, #tpu.memory_space<vmem>>, vector<1x1x32xf32>
    %157 = vector.shape_cast %156 : vector<1x1x32xf32> to vector<1x32xf32>
    %158 = vector.broadcast %157 : vector<1x32xf32> to vector<8x32xf32>
    %159 = arith.addf %155, %158 : vector<8x32xf32>
    %160 = arith.addf %3, %159 : vector<8x32xf32>
    %c0_51 = arith.constant 0 : index
    %c0_52 = arith.constant 0 : index
    %161 = vector.load %arg15[%c0_51, %c0_52] : memref<8x32xf32, #tpu.memory_space<vmem>>, vector<8x32xf32>
    tpu.vector_store %arg15[%c0_51, %c0_52], %160 {strides = array<i32>} : memref<8x32xf32, #tpu.memory_space<vmem>>, vector<8x32xf32>,
    %c0_53 = arith.constant 0 : index
    %c0_54 = arith.constant 0 : index
    %c0_55 = arith.constant 0 : index
    %162 = vector.load %arg9[%c0_53, %c0_54, %c0_55] : memref<1x1x32xf32, #tpu.memory_space<vmem>>, vector<1x1x32xf32>
    %163 = vector.shape_cast %162 : vector<1x1x32xf32> to vector<1x32xf32>
    %c0_56 = arith.constant 0 : index
    %c0_57 = arith.constant 0 : index
    %c0_58 = arith.constant 0 : index
    %164 = vector.load %arg10[%c0_56, %c0_57, %c0_58] : memref<1x1x32xf32, #tpu.memory_space<vmem>>, vector<1x1x32xf32>
    %165 = vector.shape_cast %164 : vector<1x1x32xf32> to vector<1x32xf32>
    %cst_59 = arith.constant dense<0.000000e+00> : vector<8xf32>
    %166 = vector.multi_reduction <add>, %160, %cst_59 [1] : vector<8x32xf32> to vector<8xf32>
    %167 = vector.shape_cast %166 : vector<8xf32> to vector<8x1xf32>
    %cst_60 = arith.constant 3.200000e+01 : f32
    %168 = vector.broadcast %cst_60 : f32 to vector<8x1xf32>
    %169 = arith.divf %167, %168 : vector<8x1xf32>
    %170 = vector.broadcast %169 : vector<8x1xf32> to vector<8x32xf32>
    %171 = arith.subf %160, %170 : vector<8x32xf32>
    %172 = arith.mulf %171, %171 : vector<8x32xf32>
    %cst_61 = arith.constant dense<0.000000e+00> : vector<8xf32>
    %173 = vector.multi_reduction <add>, %172, %cst_61 [1] : vector<8x32xf32> to vector<8xf32>
    %174 = vector.shape_cast %173 : vector<8xf32> to vector<8x1xf32>
    %cst_62 = arith.constant 3.200000e+01 : f32
    %175 = vector.broadcast %cst_62 : f32 to vector<8x1xf32>
    %176 = arith.divf %174, %175 : vector<8x1xf32>
    %177 = vector.broadcast %169 : vector<8x1xf32> to vector<8x32xf32>
    %178 = arith.subf %160, %177 : vector<8x32xf32>
    %cst_63 = arith.constant 9.99999974E-6 : f32
    %179 = vector.broadcast %cst_63 : f32 to vector<8x1xf32>
    %180 = arith.addf %176, %179 : vector<8x1xf32>
    %181 = math.rsqrt %180 : vector<8x1xf32>
    %182 = vector.broadcast %181 : vector<8x1xf32> to vector<8x32xf32>
    %183 = arith.mulf %178, %182 : vector<8x32xf32>
    %184 = vector.broadcast %163 : vector<1x32xf32> to vector<8x32xf32>
    %185 = arith.mulf %183, %184 : vector<8x32xf32>
    %186 = vector.broadcast %165 : vector<1x32xf32> to vector<8x32xf32>
    %187 = arith.addf %185, %186 : vector<8x32xf32>
    %188 = arith.truncf %187 : vector<8x32xf32> to vector<8x32xbf16>
    %c0_64 = arith.constant 0 : index
    %c0_65 = arith.constant 0 : index
    %c0_66 = arith.constant 0 : index
    %189 = vector.load %arg11[%c0_64, %c0_65, %c0_66] : memref<1x32x128xbf16, #tpu.memory_space<vmem>>, vector<1x32x128xbf16>
    %190 = vector.shape_cast %189 : vector<1x32x128xbf16> to vector<32x128xbf16>
    %c0_67 = arith.constant 0 : index
    %c0_68 = arith.constant 0 : index
    %c0_69 = arith.constant 0 : index
    %191 = vector.load %arg12[%c0_67, %c0_68, %c0_69] : memref<1x1x128xf32, #tpu.memory_space<vmem>>, vector<1x1x128xf32>
    %192 = vector.shape_cast %191 : vector<1x1x128xf32> to vector<1x128xf32>
    %c0_70 = arith.constant 0 : index
    %c0_71 = arith.constant 0 : index
    %c0_72 = arith.constant 0 : index
    %193 = vector.load %arg13[%c0_70, %c0_71, %c0_72] : memref<1x128x32xbf16, #tpu.memory_space<vmem>>, vector<1x128x32xbf16>
    %194 = vector.shape_cast %193 : vector<1x128x32xbf16> to vector<128x32xbf16>
    %cst_73 = arith.constant 0.000000e+00 : f32
    %195 = vector.broadcast %cst_73 : f32 to vector<8x32xf32>
    %cst_74 = arith.constant dense<0.000000e+00> : vector<8x128xf32>
    %196 = tpu.matmul %188, %190, %cst_74 {dimension_numbers = #tpu.dot_dimension_numbers<[1], [0], [0], [1], [0, 0, 1, 1], [], []>} : vector<8x32xbf16>, vector<32x128xbf16>, vector<8x128xf32> -> vector<8x128xf32>
    %197 = vector.broadcast %192 : vector<1x128xf32> to vector<8x128xf32>
    %198 = arith.addf %196, %197 : vector<8x128xf32>
    %cst_75 = arith.constant 1.702000e+00 : f32
    %199 = vector.broadcast %cst_75 : f32 to vector<8x128xf32>
    %200 = arith.mulf %199, %198 : vector<8x128xf32>
    %201 = arith.negf %200 : vector<8x128xf32>
    %202 = math.exp %201 : vector<8x128xf32>
    %cst_76 = arith.constant 1.000000e+00 : f32
    %203 = vector.broadcast %cst_76 : f32 to vector<8x128xf32>
    %204 = arith.addf %203, %202 : vector<8x128xf32>
    %205 = arith.divf %203, %204 : vector<8x128xf32>
    %206 = arith.mulf %198, %205 : vector<8x128xf32>
    %207 = arith.truncf %206 : vector<8x128xf32> to vector<8x128xbf16>
    %cst_77 = arith.constant dense<0.000000e+00> : vector<8x32xf32>
    %208 = tpu.matmul %207, %194, %cst_77 {dimension_numbers = #tpu.dot_dimension_numbers<[1], [0], [0], [1], [0, 0, 1, 1], [], []>} : vector<8x128xbf16>, vector<128x32xbf16>, vector<8x32xf32> -> vector<8x32xf32>
    %209 = arith.addf %195, %208 : vector<8x32xf32>
    %210 = arith.addf %160, %209 : vector<8x32xf32>
    %c0_78 = arith.constant 0 : index
    %c0_79 = arith.constant 0 : index
    %c0_80 = arith.constant 0 : index
    %211 = vector.load %arg14[%c0_78, %c0_79, %c0_80] : memref<1x1x32xf32, #tpu.memory_space<vmem>>, vector<1x1x32xf32>
    %212 = vector.shape_cast %211 : vector<1x1x32xf32> to vector<1x32xf32>
    %213 = vector.broadcast %212 : vector<1x32xf32> to vector<8x32xf32>
    %214 = arith.addf %210, %213 : vector<8x32xf32>
    %c0_81 = arith.constant 0 : index
    %c0_82 = arith.constant 0 : index
    %215 = vector.load %arg15[%c0_81, %c0_82] : memref<8x32xf32, #tpu.memory_space<vmem>>, vector<8x32xf32>
    tpu.vector_store %arg15[%c0_81, %c0_82], %214 {strides = array<i32>} : memref<8x32xf32, #tpu.memory_space<vmem>>, vector<8x32xf32>,
    return
  }
  func.func @transform_0(%arg0: i32, %arg1: i32) -> (i32, i32) {
    %c0_i32 = arith.constant 0 : i32
    %c0_i32_0 = arith.constant 0 : i32
    return %arg0, %c0_i32 : i32, i32
  }
  func.func @transform_1(%arg0: i32, %arg1: i32) -> (i32, i32, i32) {
    %c0_i32 = arith.constant 0 : i32
    %c0_i32_0 = arith.constant 0 : i32
    %c0_i32_1 = arith.constant 0 : i32
    return %arg1, %c0_i32, %c0_i32_0 : i32, i32, i32
  }
  func.func @transform_2(%arg0: i32, %arg1: i32) -> (i32, i32, i32) {
    %c0_i32 = arith.constant 0 : i32
    %c0_i32_0 = arith.constant 0 : i32
    %c0_i32_1 = arith.constant 0 : i32
    return %arg1, %c0_i32, %c0_i32_0 : i32, i32, i32
  }
  func.func @transform_3(%arg0: i32, %arg1: i32) -> (i32, i32, i32) {
    %c0_i32 = arith.constant 0 : i32
    %c0_i32_0 = arith.constant 0 : i32
    %c0_i32_1 = arith.constant 0 : i32
    return %arg1, %c0_i32, %c0_i32_0 : i32, i32, i32
  }
  func.func @transform_4(%arg0: i32, %arg1: i32) -> (i32, i32, i32) {
    %c0_i32 = arith.constant 0 : i32
    %c0_i32_0 = arith.constant 0 : i32
    %c0_i32_1 = arith.constant 0 : i32
    return %arg1, %c0_i32, %c0_i32_0 : i32, i32, i32
  }
  func.func @transform_5(%arg0: i32, %arg1: i32) -> (i32, i32, i32) {
    %c0_i32 = arith.constant 0 : i32
    %c0_i32_0 = arith.constant 0 : i32
    %c0_i32_1 = arith.constant 0 : i32
    return %arg1, %c0_i32, %c0_i32_0 : i32, i32, i32
  }
  func.func @transform_6(%arg0: i32, %arg1: i32) -> (i32, i32, i32) {
    %c0_i32 = arith.constant 0 : i32
    %c0_i32_0 = arith.constant 0 : i32
    %c0_i32_1 = arith.constant 0 : i32
    return %arg1, %c0_i32, %c0_i32_0 : i32, i32, i32
  }
  func.func @transform_7(%arg0: i32, %arg1: i32) -> (i32, i32, i32) {
    %c0_i32 = arith.constant 0 : i32
    %c0_i32_0 = arith.constant 0 : i32
    %c0_i32_1 = arith.constant 0 : i32
    return %arg1, %c0_i32, %c0_i32_0 : i32, i32, i32
  }
  func.func @transform_8(%arg0: i32, %arg1: i32) -> (i32, i32, i32) {
    %c0_i32 = arith.constant 0 : i32
    %c0_i32_0 = arith.constant 0 : i32
    %c0_i32_1 = arith.constant 0 : i32
    return %arg1, %c0_i32, %c0_i32_0 : i32, i32, i32
  }
  func.func @transform_9(%arg0: i32, %arg1: i32) -> (i32, i32, i32) {
    %c0_i32 = arith.constant 0 : i32
    %c0_i32_0 = arith.constant 0 : i32
    %c0_i32_1 = arith.constant 0 : i32
    return %arg1, %c0_i32, %c0_i32_0 : i32, i32, i32
  }
  func.func @transform_10(%arg0: i32, %arg1: i32) -> (i32, i32, i32) {
    %c0_i32 = arith.constant 0 : i32
    %c0_i32_0 = arith.constant 0 : i32
    %c0_i32_1 = arith.constant 0 : i32
    return %arg1, %c0_i32, %c0_i32_0 : i32, i32, i32
  }
  func.func @transform_11(%arg0: i32, %arg1: i32) -> (i32, i32, i32) {
    %c0_i32 = arith.constant 0 : i32
    %c0_i32_0 = arith.constant 0 : i32
    %c0_i32_1 = arith.constant 0 : i32
    return %arg1, %c0_i32, %c0_i32_0 : i32, i32, i32
  }
  func.func @transform_12(%arg0: i32, %arg1: i32) -> (i32, i32, i32) {
    %c0_i32 = arith.constant 0 : i32
    %c0_i32_0 = arith.constant 0 : i32
    %c0_i32_1 = arith.constant 0 : i32
    return %arg1, %c0_i32, %c0_i32_0 : i32, i32, i32
  }
  func.func @transform_13(%arg0: i32, %arg1: i32) -> (i32, i32) {
    %c0_i32 = arith.constant 0 : i32
    %c0_i32_0 = arith.constant 0 : i32
    return %arg0, %c0_i32 : i32, i32
  }
}

</mosaic_0001>

<llo_original>
// kernel: tpu_custom_call.1
$region0: #{tpu_custom_call.1}
  #allocation0 [shape = 'u32[]', space=smem, size = 0x4, offset = 0x4, fixed_abs, tag = 'smem constant byte address 0x4 - core index']
  #allocation1 [shape = 'u32[144,128]{1,0:T(1,128)}', space=vmem, size = 0x12000, scoped, tag = 'internal scratch']
  #allocation2 [shape = 'bf16[8,32]{1,0:T(8,128)(2,1)}', space=vmem, size = 0x800, scoped, tag = 'scratch operand']
  %s0 = inlined_call_operand.vmem [shape: f32[16,32], index: 0, kind: input, shape index: {}]
  %s1 = inlined_call_operand.vmem [shape: f32[2,1,32], index: 1, kind: input, shape index: {}]
  %s2 = inlined_call_operand.vmem [shape: f32[2,1,32], index: 2, kind: input, shape index: {}]
  %s3 = inlined_call_operand.vmem [shape: bf16[2,32,96], index: 3, kind: input, shape index: {}]
  %s4 = inlined_call_operand.vmem [shape: f32[2,1,96], index: 4, kind: input, shape index: {}]
  %s5 = inlined_call_operand.vmem [shape: bf16[2,32,32], index: 5, kind: input, shape index: {}]
  %s6 = inlined_call_operand.vmem [shape: f32[2,1,32], index: 6, kind: input, shape index: {}]
  %s7 = inlined_call_operand.vmem [shape: f32[2,1,32], index: 7, kind: input, shape index: {}]
  %s8 = inlined_call_operand.vmem [shape: f32[2,1,32], index: 8, kind: input, shape index: {}]
  %s9 = inlined_call_operand.vmem [shape: bf16[2,32,128], index: 9, kind: input, shape index: {}]
  %s10 = inlined_call_operand.vmem [shape: f32[2,1,128], index: 10, kind: input, shape index: {}]
  %s11 = inlined_call_operand.vmem [shape: bf16[2,128,32], index: 11, kind: input, shape index: {}]
  %s12 = inlined_call_operand.vmem [shape: f32[2,1,32], index: 12, kind: input, shape index: {}]
  %s13 = inlined_call_operand.hbm [shape: f32[16,32], index: 13, kind: output, shape index: {}]
  %s14 = sld [smem:[#allocation0]]
  $region89: #{tpu_custom_call.1} parent=0
    _
  %s16 = ssub.s32 1, %s14
  %s17 = scalar_select 0, %s16, %s14
  $region1: #{tpu_custom_call.1} parent=0
    #allocation3 [shape = 'u8[8192]{0}', space=vmem, size = 0x2000, scoped, tag = 'output window, operand 0']
    #allocation4 [shape = 's32[2]{0}', space=sflag, size = 0x8, scoped, tag = 'scoped memory for tpu_custom_call.1']
    %18 = vsyncpa [#allocation4], 0
    %s19 = scalar_lea.sflag [#allocation4], 1
    %20 = vsyncpa %s19, 0
    loop: start=0, step=1, limit=6
    $region2: #{tpu_custom_call.1} parent=1 // loop_pre_header
      _
    $region3: #{tpu_custom_call.1} parent=1 // loop_header
      %s22 = sphi 0, %s26
      %p23 = scmp.ge.s32.totalorder %s22, 6
      %s29 = sphi 0, %s41
      %s30 = sphi 0, %s37
      %s31 = sphi 0, %s29
      %s32 = sphi 0, %s30
      %s33 = sphi 0, %s31
      %s34 = sphi 0, %s32
      %s44 = sphi 0, %s46
      %s47 = sphi 0, %s44
      %s48 = sphi 0, %s47
      %s64 = sphi 0, %s48
      %s70 = sphi 0, %s72
      %s73 = sphi 0, %s70
      %s74 = sphi 0, %s73
      %s90 = sphi 0, %s74
      %s96 = sphi 0, %s98
      %s99 = sphi 0, %s96
      %s100 = sphi 0, %s99
      %s116 = sphi 0, %s100
      %s122 = sphi 0, %s124
      %s125 = sphi 0, %s122
      %s126 = sphi 0, %s125
      %s142 = sphi 0, %s126
      %s148 = sphi 0, %s150
      %s151 = sphi 0, %s148
      %s152 = sphi 0, %s151
      %s168 = sphi 0, %s152
      %s174 = sphi 0, %s176
      %s177 = sphi 0, %s174
      %s178 = sphi 0, %s177
      %s194 = sphi 0, %s178
      %s200 = sphi 0, %s202
      %s203 = sphi 0, %s200
      %s204 = sphi 0, %s203
      %s220 = sphi 0, %s204
      %s226 = sphi 0, %s228
      %s229 = sphi 0, %s226
      %s230 = sphi 0, %s229
      %s246 = sphi 0, %s230
      %s252 = sphi 0, %s254
      %s255 = sphi 0, %s252
      %s256 = sphi 0, %s255
      %s272 = sphi 0, %s256
      %s278 = sphi 0, %s280
      %s281 = sphi 0, %s278
      %s282 = sphi 0, %s281
      %s298 = sphi 0, %s282
      %s304 = sphi 0, %s306
      %s307 = sphi 0, %s304
      %s308 = sphi 0, %s307
      %s324 = sphi 0, %s308
      %s330 = sphi 0, %s332
      %s333 = sphi 0, %s330
      %s334 = sphi 0, %s333
      %s350 = sphi 0, %s334
      %s356 = sphi 0, %s358
      %s359 = sphi 0, %s356
      %s360 = sphi 0, %s359
      %s376 = sphi 0, %s360
      %s382 = sphi 0, %s384
      %s385 = sphi 0, %s382
      %s386 = sphi 0, %s385
      %s402 = sphi 0, %s386
    $region4: #{tpu_custom_call.1} parent=1 // loop_header_branch
      %25 = sbr.rel (%p23) target = $region8
    $region5: #{tpu_custom_call.1} parent=1 // loop_body
      %s27 = ssub.s32 %s22, 1
      %s28 = ssub.s32 %s22, 2
      %s35 = sadd.s32 1, %s30
      %p36 = scmp.ge.s32.totalorder %s35, 2
      %s37 = scalar_select %p36, 0, %s35
      %s38 = sadd.s32 1, %s29
      %s39 = scalar_select %p36, %s38, %s29
      %p40 = scmp.ge.s32.totalorder %s39, 2
      %s41 = scalar_select %p40, 0, %s39
      %s42 = ssub.s32 %s29, %s41
      %p43 = scmp.eq.s32.totalorder %s42, 0
      %s45 = sadd.s32 %s44, 1
      %s46 = scalar_select %p43, %s44, %s45
      %p49 = pneg %p43
      %p50 = scmp.eq.s32.totalorder %s22, 3
      %p51 = por %p49, %p50
      %p52 = scmp.ne.s32.totalorder %s44, %s47
      %p53 = scmp.eq.s32.totalorder %s22, 0
      %p54 = por %p52, %p53
      %p55 = scmp.ne.s32.totalorder %s44, %s47
      %p56 = scmp.eq.s32.totalorder %s27, 3
      %p57 = por %p55, %p56
      %p58 = scmp.ne.s32.totalorder %s47, %s48
      %p59 = scmp.eq.s32.totalorder %s27, 0
      %p60 = por %p58, %p59
      %p61 = scmp.ne.s32.totalorder %s47, %s48
      %p62 = scmp.eq.s32.totalorder %s28, 3
      %p63 = por %p61, %p62
      %p65 = scmp.ne.s32.totalorder %s48, %s64
      %p66 = scmp.eq.s32.totalorder %s28, 0
      %p67 = por %p65, %p66
      %s68 = ssub.s32 %s30, %s37
      %p69 = scmp.eq.s32.totalorder %s68, 0
      %s71 = sadd.s32 %s70, 1
      %s72 = scalar_select %p69, %s70, %s71
      %p75 = pneg %p69
      %p76 = scmp.eq.s32.totalorder %s22, 3
      %p77 = por %p75, %p76
      %p78 = scmp.ne.s32.totalorder %s70, %s73
      %p79 = scmp.eq.s32.totalorder %s22, 0
      %p80 = por %p78, %p79
      %p81 = scmp.ne.s32.totalorder %s70, %s73
      %p82 = scmp.eq.s32.totalorder %s27, 3
      %p83 = por %p81, %p82
      %p84 = scmp.ne.s32.totalorder %s73, %s74
      %p85 = scmp.eq.s32.totalorder %s27, 0
      %p86 = por %p84, %p85
      %p87 = scmp.ne.s32.totalorder %s73, %s74
      %p88 = scmp.eq.s32.totalorder %s28, 3
      %p89 = por %p87, %p88
      %p91 = scmp.ne.s32.totalorder %s74, %s90
      %p92 = scmp.eq.s32.totalorder %s28, 0
      %p93 = por %p91, %p92
      %s94 = ssub.s32 %s30, %s37
      %p95 = scmp.eq.s32.totalorder %s94, 0
      %s97 = sadd.s32 %s96, 1
      %s98 = scalar_select %p95, %s96, %s97
      %p101 = pneg %p95
      %p102 = scmp.eq.s32.totalorder %s22, 3
      %p103 = por %p101, %p102
      %p104 = scmp.ne.s32.totalorder %s96, %s99
      %p105 = scmp.eq.s32.totalorder %s22, 0
      %p106 = por %p104, %p105
      %p107 = scmp.ne.s32.totalorder %s96, %s99
      %p108 = scmp.eq.s32.totalorder %s27, 3
      %p109 = por %p107, %p108
      %p110 = scmp.ne.s32.totalorder %s99, %s100
      %p111 = scmp.eq.s32.totalorder %s27, 0
      %p112 = por %p110, %p111
      %p113 = scmp.ne.s32.totalorder %s99, %s100
      %p114 = scmp.eq.s32.totalorder %s28, 3
      %p115 = por %p113, %p114
      %p117 = scmp.ne.s32.totalorder %s100, %s116
      %p118 = scmp.eq.s32.totalorder %s28, 0
      %p119 = por %p117, %p118
      %s120 = ssub.s32 %s30, %s37
      %p121 = scmp.eq.s32.totalorder %s120, 0
      %s123 = sadd.s32 %s122, 1
      %s124 = scalar_select %p121, %s122, %s123
      %p127 = pneg %p121
      %p128 = scmp.eq.s32.totalorder %s22, 3
      %p129 = por %p127, %p128
      %p130 = scmp.ne.s32.totalorder %s122, %s125
      %p131 = scmp.eq.s32.totalorder %s22, 0
      %p132 = por %p130, %p131
      %p133 = scmp.ne.s32.totalorder %s122, %s125
      %p134 = scmp.eq.s32.totalorder %s27, 3
      %p135 = por %p133, %p134
      %p136 = scmp.ne.s32.totalorder %s125, %s126
      %p137 = scmp.eq.s32.totalorder %s27, 0
      %p138 = por %p136, %p137
      %p139 = scmp.ne.s32.totalorder %s125, %s126
      %p140 = scmp.eq.s32.totalorder %s28, 3
      %p141 = por %p139, %p140
      %p143 = scmp.ne.s32.totalorder %s126, %s142
      %p144 = scmp.eq.s32.totalorder %s28, 0
      %p145 = por %p143, %p144
      %s146 = ssub.s32 %s30, %s37
      %p147 = scmp.eq.s32.totalorder %s146, 0
      %s149 = sadd.s32 %s148, 1
      %s150 = scalar_select %p147, %s148, %s149
      %p153 = pneg %p147
      %p154 = scmp.eq.s32.totalorder %s22, 3
      %p155 = por %p153, %p154
      %p156 = scmp.ne.s32.totalorder %s148, %s151
      %p157 = scmp.eq.s32.totalorder %s22, 0
      %p158 = por %p156, %p157
      %p159 = scmp.ne.s32.totalorder %s148, %s151
      %p160 = scmp.eq.s32.totalorder %s27, 3
      %p161 = por %p159, %p160
      %p162 = scmp.ne.s32.totalorder %s151, %s152
      %p163 = scmp.eq.s32.totalorder %s27, 0
      %p164 = por %p162, %p163
      %p165 = scmp.ne.s32.totalorder %s151, %s152
      %p166 = scmp.eq.s32.totalorder %s28, 3
      %p167 = por %p165, %p166
      %p169 = scmp.ne.s32.totalorder %s152, %s168
      %p170 = scmp.eq.s32.totalorder %s28, 0
      %p171 = por %p169, %p170
      %s172 = ssub.s32 %s30, %s37
      %p173 = scmp.eq.s32.totalorder %s172, 0
      %s175 = sadd.s32 %s174, 1
      %s176 = scalar_select %p173, %s174, %s175
      %p179 = pneg %p173
      %p180 = scmp.eq.s32.totalorder %s22, 3
      %p181 = por %p179, %p180
      %p182 = scmp.ne.s32.totalorder %s174, %s177
      %p183 = scmp.eq.s32.totalorder %s22, 0
      %p184 = por %p182, %p183
      %p185 = scmp.ne.s32.totalorder %s174, %s177
      %p186 = scmp.eq.s32.totalorder %s27, 3
      %p187 = por %p185, %p186
      %p188 = scmp.ne.s32.totalorder %s177, %s178
      %p189 = scmp.eq.s32.totalorder %s27, 0
      %p190 = por %p188, %p189
      %p191 = scmp.ne.s32.totalorder %s177, %s178
      %p192 = scmp.eq.s32.totalorder %s28, 3
      %p193 = por %p191, %p192
      %p195 = scmp.ne.s32.totalorder %s178, %s194
      %p196 = scmp.eq.s32.totalorder %s28, 0
      %p197 = por %p195, %p196
      %s198 = ssub.s32 %s30, %s37
      %p199 = scmp.eq.s32.totalorder %s198, 0
      %s201 = sadd.s32 %s200, 1
      %s202 = scalar_select %p199, %s200, %s201
      %p205 = pneg %p199
      %p206 = scmp.eq.s32.totalorder %s22, 3
      %p207 = por %p205, %p206
      %p208 = scmp.ne.s32.totalorder %s200, %s203
      %p209 = scmp.eq.s32.totalorder %s22, 0
      %p210 = por %p208, %p209
      %p211 = scmp.ne.s32.totalorder %s200, %s203
      %p212 = scmp.eq.s32.totalorder %s27, 3
      %p213 = por %p211, %p212
      %p214 = scmp.ne.s32.totalorder %s203, %s204
      %p215 = scmp.eq.s32.totalorder %s27, 0
      %p216 = por %p214, %p215
      %p217 = scmp.ne.s32.totalorder %s203, %s204
      %p218 = scmp.eq.s32.totalorder %s28, 3
      %p219 = por %p217, %p218
      %p221 = scmp.ne.s32.totalorder %s204, %s220
      %p222 = scmp.eq.s32.totalorder %s28, 0
      %p223 = por %p221, %p222
      %s224 = ssub.s32 %s30, %s37
      %p225 = scmp.eq.s32.totalorder %s224, 0
      %s227 = sadd.s32 %s226, 1
      %s228 = scalar_select %p225, %s226, %s227
      %p231 = pneg %p225
      %p232 = scmp.eq.s32.totalorder %s22, 3
      %p233 = por %p231, %p232
      %p234 = scmp.ne.s32.totalorder %s226, %s229
      %p235 = scmp.eq.s32.totalorder %s22, 0
      %p236 = por %p234, %p235
      %p237 = scmp.ne.s32.totalorder %s226, %s229
      %p238 = scmp.eq.s32.totalorder %s27, 3
      %p239 = por %p237, %p238
      %p240 = scmp.ne.s32.totalorder %s229, %s230
      %p241 = scmp.eq.s32.totalorder %s27, 0
      %p242 = por %p240, %p241
      %p243 = scmp.ne.s32.totalorder %s229, %s230
      %p244 = scmp.eq.s32.totalorder %s28, 3
      %p245 = por %p243, %p244
      %p247 = scmp.ne.s32.totalorder %s230, %s246
      %p248 = scmp.eq.s32.totalorder %s28, 0
      %p249 = por %p247, %p248
      %s250 = ssub.s32 %s30, %s37
      %p251 = scmp.eq.s32.totalorder %s250, 0
      %s253 = sadd.s32 %s252, 1
      %s254 = scalar_select %p251, %s252, %s253
      %p257 = pneg %p251
      %p258 = scmp.eq.s32.totalorder %s22, 3
      %p259 = por %p257, %p258
      %p260 = scmp.ne.s32.totalorder %s252, %s255
      %p261 = scmp.eq.s32.totalorder %s22, 0
      %p262 = por %p260, %p261
      %p263 = scmp.ne.s32.totalorder %s252, %s255
      %p264 = scmp.eq.s32.totalorder %s27, 3
      %p265 = por %p263, %p264
      %p266 = scmp.ne.s32.totalorder %s255, %s256
      %p267 = scmp.eq.s32.totalorder %s27, 0
      %p268 = por %p266, %p267
      %p269 = scmp.ne.s32.totalorder %s255, %s256
      %p270 = scmp.eq.s32.totalorder %s28, 3
      %p271 = por %p269, %p270
      %p273 = scmp.ne.s32.totalorder %s256, %s272
      %p274 = scmp.eq.s32.totalorder %s28, 0
      %p275 = por %p273, %p274
      %s276 = ssub.s32 %s30, %s37
      %p277 = scmp.eq.s32.totalorder %s276, 0
      %s279 = sadd.s32 %s278, 1
      %s280 = scalar_select %p277, %s278, %s279
      %p283 = pneg %p277
      %p284 = scmp.eq.s32.totalorder %s22, 3
      %p285 = por %p283, %p284
      %p286 = scmp.ne.s32.totalorder %s278, %s281
      %p287 = scmp.eq.s32.totalorder %s22, 0
      %p288 = por %p286, %p287
      %p289 = scmp.ne.s32.totalorder %s278, %s281
      %p290 = scmp.eq.s32.totalorder %s27, 3
      %p291 = por %p289, %p290
      %p292 = scmp.ne.s32.totalorder %s281, %s282
      %p293 = scmp.eq.s32.totalorder %s27, 0
      %p294 = por %p292, %p293
      %p295 = scmp.ne.s32.totalorder %s281, %s282
      %p296 = scmp.eq.s32.totalorder %s28, 3
      %p297 = por %p295, %p296
      %p299 = scmp.ne.s32.totalorder %s282, %s298
      %p300 = scmp.eq.s32.totalorder %s28, 0
      %p301 = por %p299, %p300
      %s302 = ssub.s32 %s30, %s37
      %p303 = scmp.eq.s32.totalorder %s302, 0
      %s305 = sadd.s32 %s304, 1
      %s306 = scalar_select %p303, %s304, %s305
      %p309 = pneg %p303
      %p310 = scmp.eq.s32.totalorder %s22, 3
      %p311 = por %p309, %p310
      %p312 = scmp.ne.s32.totalorder %s304, %s307
      %p313 = scmp.eq.s32.totalorder %s22, 0
      %p314 = por %p312, %p313
      %p315 = scmp.ne.s32.totalorder %s304, %s307
      %p316 = scmp.eq.s32.totalorder %s27, 3
      %p317 = por %p315, %p316
      %p318 = scmp.ne.s32.totalorder %s307, %s308
      %p319 = scmp.eq.s32.totalorder %s27, 0
      %p320 = por %p318, %p319
      %p321 = scmp.ne.s32.totalorder %s307, %s308
      %p322 = scmp.eq.s32.totalorder %s28, 3
      %p323 = por %p321, %p322
      %p325 = scmp.ne.s32.totalorder %s308, %s324
      %p326 = scmp.eq.s32.totalorder %s28, 0
      %p327 = por %p325, %p326
      %s328 = ssub.s32 %s30, %s37
      %p329 = scmp.eq.s32.totalorder %s328, 0
      %s331 = sadd.s32 %s330, 1
      %s332 = scalar_select %p329, %s330, %s331
      %p335 = pneg %p329
      %p336 = scmp.eq.s32.totalorder %s22, 3
      %p337 = por %p335, %p336
      %p338 = scmp.ne.s32.totalorder %s330, %s333
      %p339 = scmp.eq.s32.totalorder %s22, 0
      %p340 = por %p338, %p339
      %p341 = scmp.ne.s32.totalorder %s330, %s333
      %p342 = scmp.eq.s32.totalorder %s27, 3
      %p343 = por %p341, %p342
      %p344 = scmp.ne.s32.totalorder %s333, %s334
      %p345 = scmp.eq.s32.totalorder %s27, 0
      %p346 = por %p344, %p345
      %p347 = scmp.ne.s32.totalorder %s333, %s334
      %p348 = scmp.eq.s32.totalorder %s28, 3
      %p349 = por %p347, %p348
      %p351 = scmp.ne.s32.totalorder %s334, %s350
      %p352 = scmp.eq.s32.totalorder %s28, 0
      %p353 = por %p351, %p352
      %s354 = ssub.s32 %s30, %s37
      %p355 = scmp.eq.s32.totalorder %s354, 0
      %s357 = sadd.s32 %s356, 1
      %s358 = scalar_select %p355, %s356, %s357
      %p361 = pneg %p355
      %p362 = scmp.eq.s32.totalorder %s22, 3
      %p363 = por %p361, %p362
      %p364 = scmp.ne.s32.totalorder %s356, %s359
      %p365 = scmp.eq.s32.totalorder %s22, 0
      %p366 = por %p364, %p365
      %p367 = scmp.ne.s32.totalorder %s356, %s359
      %p368 = scmp.eq.s32.totalorder %s27, 3
      %p369 = por %p367, %p368
      %p370 = scmp.ne.s32.totalorder %s359, %s360
      %p371 = scmp.eq.s32.totalorder %s27, 0
      %p372 = por %p370, %p371
      %p373 = scmp.ne.s32.totalorder %s359, %s360
      %p374 = scmp.eq.s32.totalorder %s28, 3
      %p375 = por %p373, %p374
      %p377 = scmp.ne.s32.totalorder %s360, %s376
      %p378 = scmp.eq.s32.totalorder %s28, 0
      %p379 = por %p377, %p378
      %s380 = ssub.s32 %s29, %s41
      %p381 = scmp.eq.s32.totalorder %s380, 0
      %s383 = sadd.s32 %s382, 1
      %s384 = scalar_select %p381, %s382, %s383
      %p387 = pneg %p381
      %p388 = scmp.eq.s32.totalorder %s22, 3
      %p389 = por %p387, %p388
      %p390 = scmp.ne.s32.totalorder %s382, %s385
      %p391 = scmp.eq.s32.totalorder %s22, 0
      %p392 = por %p390, %p391
      %p393 = scmp.ne.s32.totalorder %s382, %s385
      %p394 = scmp.eq.s32.totalorder %s27, 3
      %p395 = por %p393, %p394
      %p396 = scmp.ne.s32.totalorder %s385, %s386
      %p397 = scmp.eq.s32.totalorder %s27, 0
      %p398 = por %p396, %p397
      %p399 = scmp.ne.s32.totalorder %s385, %s386
      %p400 = scmp.eq.s32.totalorder %s28, 3
      %p401 = por %p399, %p400
      %p403 = scmp.ne.s32.totalorder %s386, %s402
      %p404 = scmp.eq.s32.totalorder %s28, 0
      %p405 = por %p403, %p404
      %p406 = scmp.le.s32.totalorder 1, %s22
      %p407 = scmp.lt.s32.totalorder %s22, 5
      %p408 = pnand %p406, %p407
      %p409 = pneg %p408
      // Predicated region
      $region9: #{tpu_custom_call.1} parent=5 // pred_check
        _
      $region10: #{tpu_custom_call.1} parent=5 // pred_check_branch
        %411 = sbr.rel (%p408) target = $region12
      $region11: #{tpu_custom_call.1} parent=5 // pred_region
        %s412 = ssub.s32 %s22, 1
      $region12: #{tpu_custom_call.1} parent=5 // pred_fallthru
        _
      %p413 = scmp.lt.s32.totalorder %s22, 4
      // Predicated region
      $region13: #{tpu_custom_call.1} parent=5 // pred_check
        %p414 = pneg %p413
      $region14: #{tpu_custom_call.1} parent=5 // pred_check_branch
        %416 = sbr.rel (%p414) target = $region16
      $region15: #{tpu_custom_call.1} parent=5 // pred_region
        // Predicated region
        $region17: #{tpu_custom_call.1} parent=15 // pred_check
          %p417 = pneg %p54
        $region18: #{tpu_custom_call.1} parent=15 // pred_check_branch
          %419 = sbr.rel (%p417) target = $region20
        $region19: #{tpu_custom_call.1} parent=15 // pred_region
          %p420 = scmp.lt.s32.totalorder %s29, 1
          %s421 = scalar_select %p420, %s29, 1
          %s422 = smul.addr %s421, 8
          %s423 = scalar_lea.vmem %s0, %s422
        $region20: #{tpu_custom_call.1} parent=15 // pred_fallthru
          _
        // Predicated region
        $region21: #{tpu_custom_call.1} parent=15 // pred_check
          %p424 = pneg %p80
        $region22: #{tpu_custom_call.1} parent=15 // pred_check_branch
          %426 = sbr.rel (%p424) target = $region24
        $region23: #{tpu_custom_call.1} parent=15 // pred_region
          %p427 = scmp.lt.s32.totalorder %s30, 1
          %s428 = scalar_select %p427, %s30, 1
          %s429 = scalar_lea.vmem %s1, %s428
        $region24: #{tpu_custom_call.1} parent=15 // pred_fallthru
          _
        // Predicated region
        $region25: #{tpu_custom_call.1} parent=15 // pred_check
          %p430 = pneg %p106
        $region26: #{tpu_custom_call.1} parent=15 // pred_check_branch
          %432 = sbr.rel (%p430) target = $region28
        $region27: #{tpu_custom_call.1} parent=15 // pred_region
          %p433 = scmp.lt.s32.totalorder %s30, 1
          %s434 = scalar_select %p433, %s30, 1
          %s435 = scalar_lea.vmem %s2, %s434
        $region28: #{tpu_custom_call.1} parent=15 // pred_fallthru
          _
        // Predicated region
        $region29: #{tpu_custom_call.1} parent=15 // pred_check
          %p436 = pneg %p132
        $region30: #{tpu_custom_call.1} parent=15 // pred_check_branch
          %438 = sbr.rel (%p436) target = $region32
        $region31: #{tpu_custom_call.1} parent=15 // pred_region
          %p439 = scmp.lt.s32.totalorder %s30, 1
          %s440 = scalar_select %p439, %s30, 1
          %s441 = smul.addr %s440, 4
          %s442 = smul.addr %s441, 4
          %s443 = scalar_lea.vmem %s3, %s442
        $region32: #{tpu_custom_call.1} parent=15 // pred_fallthru
          _
        // Predicated region
        $region33: #{tpu_custom_call.1} parent=15 // pred_check
          %p444 = pneg %p158
        $region34: #{tpu_custom_call.1} parent=15 // pred_check_branch
          %446 = sbr.rel (%p444) target = $region36
        $region35: #{tpu_custom_call.1} parent=15 // pred_region
          %p447 = scmp.lt.s32.totalorder %s30, 1
          %s448 = scalar_select %p447, %s30, 1
          %s449 = scalar_lea.vmem %s4, %s448
        $region36: #{tpu_custom_call.1} parent=15 // pred_fallthru
          _
        // Predicated region
        $region37: #{tpu_custom_call.1} parent=15 // pred_check
          %p450 = pneg %p184
        $region38: #{tpu_custom_call.1} parent=15 // pred_check_branch
          %452 = sbr.rel (%p450) target = $region40
        $region39: #{tpu_custom_call.1} parent=15 // pred_region
          %p453 = scmp.lt.s32.totalorder %s30, 1
          %s454 = scalar_select %p453, %s30, 1
          %s455 = smul.addr %s454, 4
          %s456 = smul.addr %s455, 4
          %s457 = scalar_lea.vmem %s5, %s456
        $region40: #{tpu_custom_call.1} parent=15 // pred_fallthru
          _
        // Predicated region
        $region41: #{tpu_custom_call.1} parent=15 // pred_check
          %p458 = pneg %p210
        $region42: #{tpu_custom_call.1} parent=15 // pred_check_branch
          %460 = sbr.rel (%p458) target = $region44
        $region43: #{tpu_custom_call.1} parent=15 // pred_region
          %p461 = scmp.lt.s32.totalorder %s30, 1
          %s462 = scalar_select %p461, %s30, 1
          %s463 = scalar_lea.vmem %s6, %s462
        $region44: #{tpu_custom_call.1} parent=15 // pred_fallthru
          _
        // Predicated region
        $region45: #{tpu_custom_call.1} parent=15 // pred_check
          %p464 = pneg %p236
        $region46: #{tpu_custom_call.1} parent=15 // pred_check_branch
          %466 = sbr.rel (%p464) target = $region48
        $region47: #{tpu_custom_call.1} parent=15 // pred_region
          %p467 = scmp.lt.s32.totalorder %s30, 1
          %s468 = scalar_select %p467, %s30, 1
          %s469 = scalar_lea.vmem %s7, %s468
        $region48: #{tpu_custom_call.1} parent=15 // pred_fallthru
          _
        // Predicated region
        $region49: #{tpu_custom_call.1} parent=15 // pred_check
          %p470 = pneg %p262
        $region50: #{tpu_custom_call.1} parent=15 // pred_check_branch
          %472 = sbr.rel (%p470) target = $region52
        $region51: #{tpu_custom_call.1} parent=15 // pred_region
          %p473 = scmp.lt.s32.totalorder %s30, 1
          %s474 = scalar_select %p473, %s30, 1
          %s475 = scalar_lea.vmem %s8, %s474
        $region52: #{tpu_custom_call.1} parent=15 // pred_fallthru
          _
        // Predicated region
        $region53: #{tpu_custom_call.1} parent=15 // pred_check
          %p476 = pneg %p288
        $region54: #{tpu_custom_call.1} parent=15 // pred_check_branch
          %478 = sbr.rel (%p476) target = $region56
        $region55: #{tpu_custom_call.1} parent=15 // pred_region
          %p479 = scmp.lt.s32.totalorder %s30, 1
          %s480 = scalar_select %p479, %s30, 1
          %s481 = smul.addr %s480, 4
          %s482 = smul.addr %s481, 4
          %s483 = scalar_lea.vmem %s9, %s482
        $region56: #{tpu_custom_call.1} parent=15 // pred_fallthru
          _
        // Predicated region
        $region57: #{tpu_custom_call.1} parent=15 // pred_check
          %p484 = pneg %p314
        $region58: #{tpu_custom_call.1} parent=15 // pred_check_branch
          %486 = sbr.rel (%p484) target = $region60
        $region59: #{tpu_custom_call.1} parent=15 // pred_region
          %p487 = scmp.lt.s32.totalorder %s30, 1
          %s488 = scalar_select %p487, %s30, 1
          %s489 = scalar_lea.vmem %s10, %s488
        $region60: #{tpu_custom_call.1} parent=15 // pred_fallthru
          _
        // Predicated region
        $region61: #{tpu_custom_call.1} parent=15 // pred_check
          %p490 = pneg %p340
        $region62: #{tpu_custom_call.1} parent=15 // pred_check_branch
          %492 = sbr.rel (%p490) target = $region64
        $region63: #{tpu_custom_call.1} parent=15 // pred_region
          %p493 = scmp.lt.s32.totalorder %s30, 1
          %s494 = scalar_select %p493, %s30, 1
          %s495 = smul.addr %s494, 16
          %s496 = smul.addr %s495, 4
          %s497 = scalar_lea.vmem %s11, %s496
        $region64: #{tpu_custom_call.1} parent=15 // pred_fallthru
          _
        // Predicated region
        $region65: #{tpu_custom_call.1} parent=15 // pred_check
          %p498 = pneg %p366
        $region66: #{tpu_custom_call.1} parent=15 // pred_check_branch
          %500 = sbr.rel (%p498) target = $region68
        $region67: #{tpu_custom_call.1} parent=15 // pred_region
          %p501 = scmp.lt.s32.totalorder %s30, 1
          %s502 = scalar_select %p501, %s30, 1
          %s503 = scalar_lea.vmem %s12, %s502
        $region68: #{tpu_custom_call.1} parent=15 // pred_fallthru
          _
      $region16: #{tpu_custom_call.1} parent=5 // pred_fallthru
        _
      %p504 = scmp.le.s32.totalorder 1, %s22
      %p505 = scmp.lt.s32.totalorder %s22, 5
      %p506 = pnand %p504, %p505
      %p507 = pneg %p506
      // Predicated region
      $region69: #{tpu_custom_call.1} parent=5 // pred_check
        _
      $region70: #{tpu_custom_call.1} parent=5 // pred_check_branch
        %509 = sbr.rel (%p506) target = $region72
      $region71: #{tpu_custom_call.1} parent=5 // pred_region
        %s510 = ssub.s32 %s22, 1
        %p511 = scmp.lt.s32.totalorder %s31, 1
        %s512 = scalar_select %p511, %s31, 1
        %s513 = smul.addr %s512, 8
        %s514 = scalar_lea.vmem %s0, %s513
        %p515 = pneg %p60
        %p516 = pneg %p57
        %p517 = scmp.lt.s32.totalorder %s32, 1
        %s518 = scalar_select %p517, %s32, 1
        %s519 = scalar_lea.vmem %s1, %s518
        %p520 = pneg %p86
        %p521 = pneg %p83
        %p522 = scmp.lt.s32.totalorder %s32, 1
        %s523 = scalar_select %p522, %s32, 1
        %s524 = scalar_lea.vmem %s2, %s523
        %p525 = pneg %p112
        %p526 = pneg %p109
        %p527 = scmp.lt.s32.totalorder %s32, 1
        %s528 = scalar_select %p527, %s32, 1
        %s529 = smul.addr %s528, 4
        %s530 = smul.addr %s529, 4
        %s531 = scalar_lea.vmem %s3, %s530
        %p532 = pneg %p138
        %p533 = pneg %p135
        %p534 = scmp.lt.s32.totalorder %s32, 1
        %s535 = scalar_select %p534, %s32, 1
        %s536 = scalar_lea.vmem %s4, %s535
        %p537 = pneg %p164
        %p538 = pneg %p161
        %p539 = scmp.lt.s32.totalorder %s32, 1
        %s540 = scalar_select %p539, %s32, 1
        %s541 = smul.addr %s540, 4
        %s542 = smul.addr %s541, 4
        %s543 = scalar_lea.vmem %s5, %s542
        %p544 = pneg %p190
        %p545 = pneg %p187
        %p546 = scmp.lt.s32.totalorder %s32, 1
        %s547 = scalar_select %p546, %s32, 1
        %s548 = scalar_lea.vmem %s6, %s547
        %p549 = pneg %p216
        %p550 = pneg %p213
        %p551 = scmp.lt.s32.totalorder %s32, 1
        %s552 = scalar_select %p551, %s32, 1
        %s553 = scalar_lea.vmem %s7, %s552
        %p554 = pneg %p242
        %p555 = pneg %p239
        %p556 = scmp.lt.s32.totalorder %s32, 1
        %s557 = scalar_select %p556, %s32, 1
        %s558 = scalar_lea.vmem %s8, %s557
        %p559 = pneg %p268
        %p560 = pneg %p265
        %p561 = scmp.lt.s32.totalorder %s32, 1
        %s562 = scalar_select %p561, %s32, 1
        %s563 = smul.addr %s562, 4
        %s564 = smul.addr %s563, 4
        %s565 = scalar_lea.vmem %s9, %s564
        %p566 = pneg %p294
        %p567 = pneg %p291
        %p568 = scmp.lt.s32.totalorder %s32, 1
        %s569 = scalar_select %p568, %s32, 1
        %s570 = scalar_lea.vmem %s10, %s569
        %p571 = pneg %p320
        %p572 = pneg %p317
        %p573 = scmp.lt.s32.totalorder %s32, 1
        %s574 = scalar_select %p573, %s32, 1
        %s575 = smul.addr %s574, 16
        %s576 = smul.addr %s575, 4
        %s577 = scalar_lea.vmem %s11, %s576
        %p578 = pneg %p346
        %p579 = pneg %p343
        %p580 = scmp.lt.s32.totalorder %s32, 1
        %s581 = scalar_select %p580, %s32, 1
        %s582 = scalar_lea.vmem %s12, %s581
        %p583 = pneg %p372
        %p584 = pneg %p369
        %p585 = pneg %p398
        %p586 = pneg %p395
        %s587 = sand.u32 %s385, 1
        %s588 = scalar_lea.sflag [#allocation4], %s587
        %s589 = sand.u32 %s385, 1
        %s590 = smul.addr %s589, 8
        %s591 = scalar_lea.vmem [#allocation3], %s590
        %p592 = scmp.lt.s32.totalorder %s31, 1
        %s593 = scalar_select %p592, %s31, 1
        %s594 = smul.addr %s593, 8
        %s595 = scalar_lea.vmem %s0, %s594
        %p596 = scmp.lt.s32.totalorder %s32, 1
        %s597 = scalar_select %p596, %s32, 1
        %s598 = scalar_lea.vmem %s1, %s597
        %p599 = scmp.lt.s32.totalorder %s32, 1
        %s600 = scalar_select %p599, %s32, 1
        %s601 = scalar_lea.vmem %s2, %s600
        %p602 = scmp.lt.s32.totalorder %s32, 1
        %s603 = scalar_select %p602, %s32, 1
        %s604 = smul.addr %s603, 4
        %s605 = smul.addr %s604, 4
        %s606 = scalar_lea.vmem %s3, %s605
        %p607 = scmp.lt.s32.totalorder %s32, 1
        %s608 = scalar_select %p607, %s32, 1
        %s609 = scalar_lea.vmem %s4, %s608
        %p610 = scmp.lt.s32.totalorder %s32, 1
        %s611 = scalar_select %p610, %s32, 1
        %s612 = smul.addr %s611, 4
        %s613 = smul.addr %s612, 4
        %s614 = scalar_lea.vmem %s5, %s613
        %p615 = scmp.lt.s32.totalorder %s32, 1
        %s616 = scalar_select %p615, %s32, 1
        %s617 = scalar_lea.vmem %s6, %s616
        %p618 = scmp.lt.s32.totalorder %s32, 1
        %s619 = scalar_select %p618, %s32, 1
        %s620 = scalar_lea.vmem %s7, %s619
        %p621 = scmp.lt.s32.totalorder %s32, 1
        %s622 = scalar_select %p621, %s32, 1
        %s623 = scalar_lea.vmem %s8, %s622
        %p624 = scmp.lt.s32.totalorder %s32, 1
        %s625 = scalar_select %p624, %s32, 1
        %s626 = smul.addr %s625, 4
        %s627 = smul.addr %s626, 4
        %s628 = scalar_lea.vmem %s9, %s627
        %p629 = scmp.lt.s32.totalorder %s32, 1
        %s630 = scalar_select %p629, %s32, 1
        %s631 = scalar_lea.vmem %s10, %s630
        %p632 = scmp.lt.s32.totalorder %s32, 1
        %s633 = scalar_select %p632, %s32, 1
        %s634 = smul.addr %s633, 16
        %s635 = smul.addr %s634, 4
        %s636 = scalar_lea.vmem %s11, %s635
        %p637 = scmp.lt.s32.totalorder %s32, 1
        %s638 = scalar_select %p637, %s32, 1
        %s639 = scalar_lea.vmem %s12, %s638
        %p641 = scmp.eq.s32.totalorder %s32, 0
        // Predicated region
        $region73: #{tpu_custom_call.1} parent=71 // pred_check
          %p642 = pneg %p641
        $region74: #{tpu_custom_call.1} parent=71 // pred_check_branch
          %644 = sbr.rel (%p642) target = $region76
        $region75: #{tpu_custom_call.1} parent=71 // pred_region
          %v645 = vld [vmem:[%s595] sm:$0xff]
          %vm646 = vcmask 261120
          %647 = vst.msk [vmem:[%s591] sm:$0xff] %vm646, %v645
        $region76: #{tpu_custom_call.1} parent=71 // pred_fallthru
          _
        %v648 = vld [vmem:[%s591] sm:$0xff]
        %v649 = vld [vmem:[%s598] sm:$0x1]
        %v650 = vld [vmem:[%s601] sm:$0x1]
        %vm651 = vcmask 261120
        %v652 = vsel %vm651, %v648, 0.0
        %653 = vadd.xlane.f32.xlu0 %v652
        %v654 = vpop.xlane.xlu0 %653
        %v655 = vrcp.pop 32.0
        %v656 = vmul.f32 %v654, %v655
        %v657 = vsub.f32 %v648, %v656
        %v658 = vmul.f32 %v657, %v657
        %v659 = vsel %vm651, %v658, 0.0
        %660 = vadd.xlane.f32.xlu0 %v659
        %v661 = vpop.xlane.xlu0 %660
        %v662 = vmul.f32 %v661, %v655
        %v663 = vadd.f32 %v662, 1e-05
        %v664 = vrsqrt.pop %v663
        %v665 = vmul.f32 %v657, %v664
        %v667 = vlaneseq
        %v668 = vshrl.u32 %v667, 7
        %v669 = vsub.s32 0, %v668
        %v670 = vrot.slane %v649, %v669
        %v672 = vmul.f32 %v665, %v670
        %v674 = vlaneseq
        %v675 = vshrl.u32 %v674, 7
        %v676 = vsub.s32 0, %v675
        %v677 = vrot.slane %v650, %v676
        %v679 = vadd.f32 %v672, %v677
        %v680 = vpack.c.bf16 %v679, %v679
        %v681 = vld [vmem:[%s606] sm:$0xf]
        %v682 = vld [vmem:[%s606 + $0x4] sm:$0xf]
        %v683 = vld [vmem:[%s606 + $0x8] sm:$0xf]
        %v684 = vld [vmem:[%s606 + $0xc] sm:$0xf]
        %v685 = vld [vmem:[%s609] sm:$0x1]
        %v687 = vlaneseq
        %v688 = vshrl.u32 %v687, 7
        %v689 = vsub.s32 0, %v688
        %v690 = vrot.slane %v685, %v689
        %v696 = vunpack.c.l.b16 %v681
        %v697 = vunpack.c.l.b16 %v682
        %v698 = vunpack.c.l.b16 %v683
        %v699 = vunpack.c.l.b16 %v684
        %v700 = vpack.c.b16 %v697, %v696
        %v701 = vpack.c.b16 %v699, %v698
        %v705 = vsel %vm651, %v680, 0
        %707 = vmatprep.subr.bf16.mxu0 0
        %708 = vmatpush1.bf16.msra.mxu0 %v700
        %709 = vmatprep.subr.bf16.mxu0 0
        %710 = vmatpush1.bf16.msra.mxu0 %v701
        %711 = vmatprep.subr.bf16.mxu0 0
        %712 = vmatpush1.bf16.msra.mxu0 0
        %713 = vmatprep.subr.bf16.mxu0 0
        %714 = vmatpush1.bf16.msra.mxu0 0
        %715 = vmatprep.subr.bf16.mxu0 0
        %716 = vmatpush1.bf16.msra.mxu0 0
        %717 = vmatprep.subr.bf16.mxu0 0
        %718 = vmatpush1.bf16.msra.mxu0 0
        %719 = vmatprep.subr.bf16.mxu0 0
        %720 = vmatpush1.bf16.msra.mxu0 0
        %721 = vmatprep.subr.bf16.mxu0 0
        %722 = vmatpush1.bf16.msra.mxu0 0
        %723 = vmatprep.subr.bf16.mxu0 0
        %724 = vmatpush1.bf16.msra.mxu0 0
        %725 = vmatprep.subr.bf16.mxu0 0
        %726 = vmatpush1.bf16.msra.mxu0 0
        %727 = vmatprep.subr.bf16.mxu0 0
        %728 = vmatpush1.bf16.msra.mxu0 0
        %729 = vmatprep.subr.bf16.mxu0 0
        %730 = vmatpush1.bf16.msra.mxu0 0
        %731 = vmatprep.subr.bf16.mxu0 0
        %732 = vmatpush1.bf16.msra.mxu0 0
        %733 = vmatprep.subr.bf16.mxu0 0
        %734 = vmatpush1.bf16.msra.mxu0 0
        %735 = vmatprep.subr.bf16.mxu0 0
        %736 = vmatpush1.bf16.msra.mxu0 0
        %737 = vmatprep.subr.bf16.mxu0 0
        %738 = vmatpush1.bf16.msra.mxu0 0
        %739 = vmatprep.mubr.bf16.mxu0 0
        %740 = vmatmul.mubr.bf16.gmra.mrb[0].mxu0 %v705
        %v741 = vpop.f32.mrb[0].mxu0
        %v742 = vadd.f32 %v690, %v741
        %v743 = vpop.f32.mrb[0].mxu0
        %v744 = vpop.f32.mrb[0].mxu0
        %v745 = vpop.f32.mrb[0].mxu0
        %746 = vdwg.mxu0
        %v747 = vlaneseq
        %v748 = vshrl.u32 %v747, 7
        %v749 = vlaneseq
        %v750 = vand.u32 %v749, 127
        %vm751 = vcmp.ge.s32.totalorder %v750, 8
        %vm752 = vcmp.gt.s32.totalorder %v750, %v748
        %vm753 = vmor %vm751, %vm752
        %v754 = vsel %vm753, -1e+30, 0.0
        %v755 = vpack.c.bf16 %v742, %v742
        %757 = vrot.lane.b32.xlu0 %v755, 96
        %v758 = vpop.permute.xlu0 %757
        %vm759 = vcmask 64512
        %v761 = vsel %vm759, %v755, 0
        %v764 = vsel %vm759, %v758, 0
        %766 = vmatprep.subr.bf16.mxu0 0
        %767 = vmatpush1.bf16.xpose.msra.mxu0 %v764
        %768 = vmatprep.subr.bf16.mxu0 0
        %769 = vmatpush1.bf16.xpose.msra.mxu0 0
        %770 = vmatprep.subr.bf16.mxu0 0
        %771 = vmatpush1.bf16.xpose.msra.mxu0 0
        %772 = vmatprep.subr.bf16.mxu0 0
        %773 = vmatpush1.bf16.xpose.msra.mxu0 0
        %774 = vmatprep.subr.bf16.mxu0 0
        %775 = vmatpush1.bf16.xpose.msra.mxu0 0
        %776 = vmatprep.subr.bf16.mxu0 0
        %777 = vmatpush1.bf16.xpose.msra.mxu0 0
        %778 = vmatprep.subr.bf16.mxu0 0
        %779 = vmatpush1.bf16.xpose.msra.mxu0 0
        %780 = vmatprep.subr.bf16.mxu0 0
        %781 = vmatpush1.bf16.xpose.msra.mxu0 0
        %782 = vmatprep.subr.bf16.mxu0 0
        %783 = vmatpush1.bf16.xpose.msra.mxu0 0
        %784 = vmatprep.subr.bf16.mxu0 0
        %785 = vmatpush1.bf16.xpose.msra.mxu0 0
        %786 = vmatprep.subr.bf16.mxu0 0
        %787 = vmatpush1.bf16.xpose.msra.mxu0 0
        %788 = vmatprep.subr.bf16.mxu0 0
        %789 = vmatpush1.bf16.xpose.msra.mxu0 0
        %790 = vmatprep.subr.bf16.mxu0 0
        %791 = vmatpush1.bf16.xpose.msra.mxu0 0
        %792 = vmatprep.subr.bf16.mxu0 0
        %793 = vmatpush1.bf16.xpose.msra.mxu0 0
        %794 = vmatprep.subr.bf16.mxu0 0
        %795 = vmatpush1.bf16.xpose.msra.mxu0 0
        %796 = vmatprep.subr.bf16.mxu0 0
        %797 = vmatpush1.bf16.xpose.msra.mxu0 0
        %798 = vmatprep.mubr.bf16.mxu0 0
        %799 = vmatmul.mubr.bf16.gmra.mrb[0].mxu0 %v761
        %v800 = vpop.f32.mrb[0].mxu0
        %v801 = vadd.f32 %v754, %v800
        %v802 = vpop.f32.mrb[0].mxu0
        %v803 = vpop.f32.mrb[0].mxu0
        %v804 = vpop.f32.mrb[0].mxu0
        %805 = vdwg.mxu0
        %v806 = vsel %vm759, %v801, -inf
        %807 = vmax.xlane.f32.xlu0 %v806
        %v808 = vpop.xlane.xlu0 %807
        %v809 = vsub.f32 %v801, %v808
        %v810 = vmul.f32 %v809, 1.442695
        %v811 = vpow.pop %v810
        %v812 = vsel %vm759, %v811, 0.0
        %813 = vadd.xlane.f32.xlu0 %v812
        %v814 = vpop.xlane.xlu0 %813
        %v815 = vrcp.pop %v814
        %v816 = vmul.f32 %v811, %v815
        %v817 = vpack.c.bf16 %v816, %v816
        %818 = vrot.lane.b32.xlu0 %v755, 64
        %v819 = vpop.permute.xlu0 %818
        %v821 = vsel %vm759, %v817, 0
        %vm823 = vcmask 1043456
        %v825 = vsel %vm823, %v819, 0
        %827 = vmatprep.subr.bf16.mxu0 0
        %828 = vmatpush1.bf16.msra.mxu0 %v825
        %829 = vmatprep.subr.bf16.mxu0 0
        %830 = vmatpush1.bf16.msra.mxu0 0
        %831 = vmatprep.subr.bf16.mxu0 0
        %832 = vmatpush1.bf16.msra.mxu0 0
        %833 = vmatprep.subr.bf16.mxu0 0
        %834 = vmatpush1.bf16.msra.mxu0 0
        %835 = vmatprep.subr.bf16.mxu0 0
        %836 = vmatpush1.bf16.msra.mxu0 0
        %837 = vmatprep.subr.bf16.mxu0 0
        %838 = vmatpush1.bf16.msra.mxu0 0
        %839 = vmatprep.subr.bf16.mxu0 0
        %840 = vmatpush1.bf16.msra.mxu0 0
        %841 = vmatprep.subr.bf16.mxu0 0
        %842 = vmatpush1.bf16.msra.mxu0 0
        %843 = vmatprep.subr.bf16.mxu0 0
        %844 = vmatpush1.bf16.msra.mxu0 0
        %845 = vmatprep.subr.bf16.mxu0 0
        %846 = vmatpush1.bf16.msra.mxu0 0
        %847 = vmatprep.subr.bf16.mxu0 0
        %848 = vmatpush1.bf16.msra.mxu0 0
        %849 = vmatprep.subr.bf16.mxu0 0
        %850 = vmatpush1.bf16.msra.mxu0 0
        %851 = vmatprep.subr.bf16.mxu0 0
        %852 = vmatpush1.bf16.msra.mxu0 0
        %853 = vmatprep.subr.bf16.mxu0 0
        %854 = vmatpush1.bf16.msra.mxu0 0
        %855 = vmatprep.subr.bf16.mxu0 0
        %856 = vmatpush1.bf16.msra.mxu0 0
        %857 = vmatprep.subr.bf16.mxu0 0
        %858 = vmatpush1.bf16.msra.mxu0 0
        %859 = vmatprep.mubr.bf16.mxu0 0
        %860 = vmatmul.mubr.bf16.gmra.mrb[0].mxu0 %v821
        %v861 = vpop.f32.mrb[0].mxu0
        %v862 = vadd.f32 0.0, %v861
        %v863 = vpop.f32.mrb[0].mxu0
        %v864 = vpop.f32.mrb[0].mxu0
        %v865 = vpop.f32.mrb[0].mxu0
        %866 = vdwg.mxu0
        %v867 = vpack.c.bf16 %v862, %v862
        %vm868 = vcmask 60416
        %869 = vst.msk [vmem:[#allocation2] sm:$0xf] %vm868, %v867
        %870 = vrot.lane.b32.xlu0 %v755, 120
        %v871 = vpop.permute.xlu0 %870
        %872 = vrot.lane.b32.xlu0 %v755, 88
        %v873 = vpop.permute.xlu0 %872
        %v875 = vsel %vm759, %v871, 0
        %v878 = vsel %vm759, %v873, 0
        %880 = vmatprep.subr.bf16.mxu0 0
        %881 = vmatpush1.bf16.xpose.msra.mxu0 %v878
        %882 = vmatprep.subr.bf16.mxu0 0
        %883 = vmatpush1.bf16.xpose.msra.mxu0 0
        %884 = vmatprep.subr.bf16.mxu0 0
        %885 = vmatpush1.bf16.xpose.msra.mxu0 0
        %886 = vmatprep.subr.bf16.mxu0 0
        %887 = vmatpush1.bf16.xpose.msra.mxu0 0
        %888 = vmatprep.subr.bf16.mxu0 0
        %889 = vmatpush1.bf16.xpose.msra.mxu0 0
        %890 = vmatprep.subr.bf16.mxu0 0
        %891 = vmatpush1.bf16.xpose.msra.mxu0 0
        %892 = vmatprep.subr.bf16.mxu0 0
        %893 = vmatpush1.bf16.xpose.msra.mxu0 0
        %894 = vmatprep.subr.bf16.mxu0 0
        %895 = vmatpush1.bf16.xpose.msra.mxu0 0
        %896 = vmatprep.subr.bf16.mxu0 0
        %897 = vmatpush1.bf16.xpose.msra.mxu0 0
        %898 = vmatprep.subr.bf16.mxu0 0
        %899 = vmatpush1.bf16.xpose.msra.mxu0 0
        %900 = vmatprep.subr.bf16.mxu0 0
        %901 = vmatpush1.bf16.xpose.msra.mxu0 0
        %902 = vmatprep.subr.bf16.mxu0 0
        %903 = vmatpush1.bf16.xpose.msra.mxu0 0
        %904 = vmatprep.subr.bf16.mxu0 0
        %905 = vmatpush1.bf16.xpose.msra.mxu0 0
        %906 = vmatprep.subr.bf16.mxu0 0
        %907 = vmatpush1.bf16.xpose.msra.mxu0 0
        %908 = vmatprep.subr.bf16.mxu0 0
        %909 = vmatpush1.bf16.xpose.msra.mxu0 0
        %910 = vmatprep.subr.bf16.mxu0 0
        %911 = vmatpush1.bf16.xpose.msra.mxu0 0
        %912 = vmatprep.mubr.bf16.mxu0 0
        %913 = vmatmul.mubr.bf16.gmra.mrb[0].mxu0 %v875
        %v914 = vpop.f32.mrb[0].mxu0
        %v915 = vadd.f32 %v754, %v914
        %v916 = vpop.f32.mrb[0].mxu0
        %v917 = vpop.f32.mrb[0].mxu0
        %v918 = vpop.f32.mrb[0].mxu0
        %919 = vdwg.mxu0
        %v920 = vsel %vm759, %v915, -inf
        %921 = vmax.xlane.f32.xlu0 %v920
        %v922 = vpop.xlane.xlu0 %921
        %v923 = vsub.f32 %v915, %v922
        %v924 = vmul.f32 %v923, 1.442695
        %v925 = vpow.pop %v924
        %v926 = vsel %vm759, %v925, 0.0
        %927 = vadd.xlane.f32.xlu0 %v926
        %v928 = vpop.xlane.xlu0 %927
        %v929 = vrcp.pop %v928
        %v930 = vmul.f32 %v925, %v929
        %v931 = vpack.c.bf16 %v930, %v930
        %932 = vrot.lane.b32.xlu0 %v755, 56
        %v933 = vpop.permute.xlu0 %932
        %v935 = vsel %vm759, %v931, 0
        %v938 = vsel %vm823, %v933, 0
        %940 = vmatprep.subr.bf16.mxu0 0
        %941 = vmatpush1.bf16.msra.mxu0 %v938
        %942 = vmatprep.subr.bf16.mxu0 0
        %943 = vmatpush1.bf16.msra.mxu0 0
        %944 = vmatprep.subr.bf16.mxu0 0
        %945 = vmatpush1.bf16.msra.mxu0 0
        %946 = vmatprep.subr.bf16.mxu0 0
        %947 = vmatpush1.bf16.msra.mxu0 0
        %948 = vmatprep.subr.bf16.mxu0 0
        %949 = vmatpush1.bf16.msra.mxu0 0
        %950 = vmatprep.subr.bf16.mxu0 0
        %951 = vmatpush1.bf16.msra.mxu0 0
        %952 = vmatprep.subr.bf16.mxu0 0
        %953 = vmatpush1.bf16.msra.mxu0 0
        %954 = vmatprep.subr.bf16.mxu0 0
        %955 = vmatpush1.bf16.msra.mxu0 0
        %956 = vmatprep.subr.bf16.mxu0 0
        %957 = vmatpush1.bf16.msra.mxu0 0
        %958 = vmatprep.subr.bf16.mxu0 0
        %959 = vmatpush1.bf16.msra.mxu0 0
        %960 = vmatprep.subr.bf16.mxu0 0
        %961 = vmatpush1.bf16.msra.mxu0 0
        %962 = vmatprep.subr.bf16.mxu0 0
        %963 = vmatpush1.bf16.msra.mxu0 0
        %964 = vmatprep.subr.bf16.mxu0 0
        %965 = vmatpush1.bf16.msra.mxu0 0
        %966 = vmatprep.subr.bf16.mxu0 0
        %967 = vmatpush1.bf16.msra.mxu0 0
        %968 = vmatprep.subr.bf16.mxu0 0
        %969 = vmatpush1.bf16.msra.mxu0 0
        %970 = vmatprep.subr.bf16.mxu0 0
        %971 = vmatpush1.bf16.msra.mxu0 0
        %972 = vmatprep.mubr.bf16.mxu0 0
        %973 = vmatmul.mubr.bf16.gmra.mrb[0].mxu0 %v935
        %v974 = vpop.f32.mrb[0].mxu0
        %v975 = vadd.f32 0.0, %v974
        %v976 = vpop.f32.mrb[0].mxu0
        %v977 = vpop.f32.mrb[0].mxu0
        %v978 = vpop.f32.mrb[0].mxu0
        %979 = vdwg.mxu0
        %v980 = vpack.c.bf16 %v975, %v975
        %v982 = vunpack.c.l.b16 %v980
        %v983 = vpack.c.b16 %v982, %v982
        %984 = vrot.lane.b32.xlu0 %v983, 8
        %v985 = vpop.permute.xlu0 %984
        %vm987 = vcmask 126016
        %988 = vst.msk [vmem:[#allocation2] sm:$0xf] %vm987, %v985
        %989 = vrot.lane.b32.xlu0 %v755, 112
        %v990 = vpop.permute.xlu0 %989
        %991 = vrot.lane.b32.xlu0 %v755, 80
        %v992 = vpop.permute.xlu0 %991
        %v994 = vsel %vm759, %v990, 0
        %v997 = vsel %vm759, %v992, 0
        %999 = vmatprep.subr.bf16.mxu0 0
        %1000 = vmatpush1.bf16.xpose.msra.mxu0 %v997
        %1001 = vmatprep.subr.bf16.mxu0 0
        %1002 = vmatpush1.bf16.xpose.msra.mxu0 0
        %1003 = vmatprep.subr.bf16.mxu0 0
        %1004 = vmatpush1.bf16.xpose.msra.mxu0 0
        %1005 = vmatprep.subr.bf16.mxu0 0
        %1006 = vmatpush1.bf16.xpose.msra.mxu0 0
        %1007 = vmatprep.subr.bf16.mxu0 0
        %1008 = vmatpush1.bf16.xpose.msra.mxu0 0
        %1009 = vmatprep.subr.bf16.mxu0 0
        %1010 = vmatpush1.bf16.xpose.msra.mxu0 0
        %1011 = vmatprep.subr.bf16.mxu0 0
        %1012 = vmatpush1.bf16.xpose.msra.mxu0 0
        %1013 = vmatprep.subr.bf16.mxu0 0
        %1014 = vmatpush1.bf16.xpose.msra.mxu0 0
        %1015 = vmatprep.subr.bf16.mxu0 0
        %1016 = vmatpush1.bf16.xpose.msra.mxu0 0
        %1017 = vmatprep.subr.bf16.mxu0 0
        %1018 = vmatpush1.bf16.xpose.msra.mxu0 0
        %1019 = vmatprep.subr.bf16.mxu0 0
        %1020 = vmatpush1.bf16.xpose.msra.mxu0 0
        %1021 = vmatprep.subr.bf16.mxu0 0
        %1022 = vmatpush1.bf16.xpose.msra.mxu0 0
        %1023 = vmatprep.subr.bf16.mxu0 0
        %1024 = vmatpush1.bf16.xpose.msra.mxu0 0
        %1025 = vmatprep.subr.bf16.mxu0 0
        %1026 = vmatpush1.bf16.xpose.msra.mxu0 0
        %1027 = vmatprep.subr.bf16.mxu0 0
        %1028 = vmatpush1.bf16.xpose.msra.mxu0 0
        %1029 = vmatprep.subr.bf16.mxu0 0
        %1030 = vmatpush1.bf16.xpose.msra.mxu0 0
        %1031 = vmatprep.mubr.bf16.mxu0 0
        %1032 = vmatmul.mubr.bf16.gmra.mrb[0].mxu0 %v994
        %v1033 = vpop.f32.mrb[0].mxu0
        %v1034 = vadd.f32 %v754, %v1033
        %v1035 = vpop.f32.mrb[0].mxu0
        %v1036 = vpop.f32.mrb[0].mxu0
        %v1037 = vpop.f32.mrb[0].mxu0
        %1038 = vdwg.mxu0
        %v1039 = vsel %vm759, %v1034, -inf
        %1040 = vmax.xlane.f32.xlu0 %v1039
        %v1041 = vpop.xlane.xlu0 %1040
        %v1042 = vsub.f32 %v1034, %v1041
        %v1043 = vmul.f32 %v1042, 1.442695
        %v1044 = vpow.pop %v1043
        %v1045 = vsel %vm759, %v1044, 0.0
        %1046 = vadd.xlane.f32.xlu0 %v1045
        %v1047 = vpop.xlane.xlu0 %1046
        %v1048 = vrcp.pop %v1047
        %v1049 = vmul.f32 %v1044, %v1048
        %v1050 = vpack.c.bf16 %v1049, %v1049
        %1051 = vrot.lane.b32.xlu0 %v755, 48
        %v1052 = vpop.permute.xlu0 %1051
        %v1054 = vsel %vm759, %v1050, 0
        %v1057 = vsel %vm823, %v1052, 0
        %1059 = vmatprep.subr.bf16.mxu0 0
        %1060 = vmatpush1.bf16.msra.mxu0 %v1057
        %1061 = vmatprep.subr.bf16.mxu0 0
        %1062 = vmatpush1.bf16.msra.mxu0 0
        %1063 = vmatprep.subr.bf16.mxu0 0
        %1064 = vmatpush1.bf16.msra.mxu0 0
        %1065 = vmatprep.subr.bf16.mxu0 0
        %1066 = vmatpush1.bf16.msra.mxu0 0
        %1067 = vmatprep.subr.bf16.mxu0 0
        %1068 = vmatpush1.bf16.msra.mxu0 0
        %1069 = vmatprep.subr.bf16.mxu0 0
        %1070 = vmatpush1.bf16.msra.mxu0 0
        %1071 = vmatprep.subr.bf16.mxu0 0
        %1072 = vmatpush1.bf16.msra.mxu0 0
        %1073 = vmatprep.subr.bf16.mxu0 0
        %1074 = vmatpush1.bf16.msra.mxu0 0
        %1075 = vmatprep.subr.bf16.mxu0 0
        %1076 = vmatpush1.bf16.msra.mxu0 0
        %1077 = vmatprep.subr.bf16.mxu0 0
        %1078 = vmatpush1.bf16.msra.mxu0 0
        %1079 = vmatprep.subr.bf16.mxu0 0
        %1080 = vmatpush1.bf16.msra.mxu0 0
        %1081 = vmatprep.subr.bf16.mxu0 0
        %1082 = vmatpush1.bf16.msra.mxu0 0
        %1083 = vmatprep.subr.bf16.mxu0 0
        %1084 = vmatpush1.bf16.msra.mxu0 0
        %1085 = vmatprep.subr.bf16.mxu0 0
        %1086 = vmatpush1.bf16.msra.mxu0 0
        %1087 = vmatprep.subr.bf16.mxu0 0
        %1088 = vmatpush1.bf16.msra.mxu0 0
        %1089 = vmatprep.subr.bf16.mxu0 0
        %1090 = vmatpush1.bf16.msra.mxu0 0
        %1091 = vmatprep.mubr.bf16.mxu0 0
        %1092 = vmatmul.mubr.bf16.gmra.mrb[0].mxu0 %v1054
        %v1093 = vpop.f32.mrb[0].mxu0
        %v1094 = vadd.f32 0.0, %v1093
        %v1095 = vpop.f32.mrb[0].mxu0
        %v1096 = vpop.f32.mrb[0].mxu0
        %v1097 = vpop.f32.mrb[0].mxu0
        %1098 = vdwg.mxu0
        %v1099 = vpack.c.bf16 %v1094, %v1094
        %v1101 = vunpack.c.l.b16 %v1099
        %v1102 = vpack.c.b16 %v1101, %v1101
        %1103 = vrot.lane.b32.xlu0 %v1102, 16
        %v1104 = vpop.permute.xlu0 %1103
        %vm1106 = vcmask 191616
        %1107 = vst.msk [vmem:[#allocation2] sm:$0xf] %vm1106, %v1104
        %1108 = vrot.lane.b32.xlu0 %v755, 104
        %v1109 = vpop.permute.xlu0 %1108
        %1110 = vrot.lane.b32.xlu0 %v755, 72
        %v1111 = vpop.permute.xlu0 %1110
        %v1113 = vsel %vm759, %v1109, 0
        %v1116 = vsel %vm759, %v1111, 0
        %1118 = vmatprep.subr.bf16.mxu0 0
        %1119 = vmatpush1.bf16.xpose.msra.mxu0 %v1116
        %1120 = vmatprep.subr.bf16.mxu0 0
        %1121 = vmatpush1.bf16.xpose.msra.mxu0 0
        %1122 = vmatprep.subr.bf16.mxu0 0
        %1123 = vmatpush1.bf16.xpose.msra.mxu0 0
        %1124 = vmatprep.subr.bf16.mxu0 0
        %1125 = vmatpush1.bf16.xpose.msra.mxu0 0
        %1126 = vmatprep.subr.bf16.mxu0 0
        %1127 = vmatpush1.bf16.xpose.msra.mxu0 0
        %1128 = vmatprep.subr.bf16.mxu0 0
        %1129 = vmatpush1.bf16.xpose.msra.mxu0 0
        %1130 = vmatprep.subr.bf16.mxu0 0
        %1131 = vmatpush1.bf16.xpose.msra.mxu0 0
        %1132 = vmatprep.subr.bf16.mxu0 0
        %1133 = vmatpush1.bf16.xpose.msra.mxu0 0
        %1134 = vmatprep.subr.bf16.mxu0 0
        %1135 = vmatpush1.bf16.xpose.msra.mxu0 0
        %1136 = vmatprep.subr.bf16.mxu0 0
        %1137 = vmatpush1.bf16.xpose.msra.mxu0 0
        %1138 = vmatprep.subr.bf16.mxu0 0
        %1139 = vmatpush1.bf16.xpose.msra.mxu0 0
        %1140 = vmatprep.subr.bf16.mxu0 0
        %1141 = vmatpush1.bf16.xpose.msra.mxu0 0
        %1142 = vmatprep.subr.bf16.mxu0 0
        %1143 = vmatpush1.bf16.xpose.msra.mxu0 0
        %1144 = vmatprep.subr.bf16.mxu0 0
        %1145 = vmatpush1.bf16.xpose.msra.mxu0 0
        %1146 = vmatprep.subr.bf16.mxu0 0
        %1147 = vmatpush1.bf16.xpose.msra.mxu0 0
        %1148 = vmatprep.subr.bf16.mxu0 0
        %1149 = vmatpush1.bf16.xpose.msra.mxu0 0
        %1150 = vmatprep.mubr.bf16.mxu0 0
        %1151 = vmatmul.mubr.bf16.gmra.mrb[0].mxu0 %v1113
        %v1152 = vpop.f32.mrb[0].mxu0
        %v1153 = vadd.f32 %v754, %v1152
        %v1154 = vpop.f32.mrb[0].mxu0
        %v1155 = vpop.f32.mrb[0].mxu0
        %v1156 = vpop.f32.mrb[0].mxu0
        %1157 = vdwg.mxu0
        %v1158 = vsel %vm759, %v1153, -inf
        %1159 = vmax.xlane.f32.xlu0 %v1158
        %v1160 = vpop.xlane.xlu0 %1159
        %v1161 = vsub.f32 %v1153, %v1160
        %v1162 = vmul.f32 %v1161, 1.442695
        %v1163 = vpow.pop %v1162
        %v1164 = vsel %vm759, %v1163, 0.0
        %1165 = vadd.xlane.f32.xlu0 %v1164
        %v1166 = vpop.xlane.xlu0 %1165
        %v1167 = vrcp.pop %v1166
        %v1168 = vmul.f32 %v1163, %v1167
        %v1169 = vpack.c.bf16 %v1168, %v1168
        %1170 = vrot.lane.b32.xlu0 %v755, 40
        %v1171 = vpop.permute.xlu0 %1170
        %v1173 = vsel %vm759, %v1169, 0
        %v1176 = vsel %vm823, %v1171, 0
        %1178 = vmatprep.subr.bf16.mxu0 0
        %1179 = vmatpush1.bf16.msra.mxu0 %v1176
        %1180 = vmatprep.subr.bf16.mxu0 0
        %1181 = vmatpush1.bf16.msra.mxu0 0
        %1182 = vmatprep.subr.bf16.mxu0 0
        %1183 = vmatpush1.bf16.msra.mxu0 0
        %1184 = vmatprep.subr.bf16.mxu0 0
        %1185 = vmatpush1.bf16.msra.mxu0 0
        %1186 = vmatprep.subr.bf16.mxu0 0
        %1187 = vmatpush1.bf16.msra.mxu0 0
        %1188 = vmatprep.subr.bf16.mxu0 0
        %1189 = vmatpush1.bf16.msra.mxu0 0
        %1190 = vmatprep.subr.bf16.mxu0 0
        %1191 = vmatpush1.bf16.msra.mxu0 0
        %1192 = vmatprep.subr.bf16.mxu0 0
        %1193 = vmatpush1.bf16.msra.mxu0 0
        %1194 = vmatprep.subr.bf16.mxu0 0
        %1195 = vmatpush1.bf16.msra.mxu0 0
        %1196 = vmatprep.subr.bf16.mxu0 0
        %1197 = vmatpush1.bf16.msra.mxu0 0
        %1198 = vmatprep.subr.bf16.mxu0 0
        %1199 = vmatpush1.bf16.msra.mxu0 0
        %1200 = vmatprep.subr.bf16.mxu0 0
        %1201 = vmatpush1.bf16.msra.mxu0 0
        %1202 = vmatprep.subr.bf16.mxu0 0
        %1203 = vmatpush1.bf16.msra.mxu0 0
        %1204 = vmatprep.subr.bf16.mxu0 0
        %1205 = vmatpush1.bf16.msra.mxu0 0
        %1206 = vmatprep.subr.bf16.mxu0 0
        %1207 = vmatpush1.bf16.msra.mxu0 0
        %1208 = vmatprep.subr.bf16.mxu0 0
        %1209 = vmatpush1.bf16.msra.mxu0 0
        %1210 = vmatprep.mubr.bf16.mxu0 0
        %1211 = vmatmul.mubr.bf16.gmra.mrb[0].mxu0 %v1173
        %v1212 = vpop.f32.mrb[0].mxu0
        %v1213 = vadd.f32 0.0, %v1212
        %v1214 = vpop.f32.mrb[0].mxu0
        %v1215 = vpop.f32.mrb[0].mxu0
        %v1216 = vpop.f32.mrb[0].mxu0
        %1217 = vdwg.mxu0
        %v1218 = vpack.c.bf16 %v1213, %v1213
        %v1220 = vunpack.c.l.b16 %v1218
        %v1221 = vpack.c.b16 %v1220, %v1220
        %1222 = vrot.lane.b32.xlu0 %v1221, 24
        %v1223 = vpop.permute.xlu0 %1222
        %vm1225 = vcmask 257216
        %1226 = vst.msk [vmem:[#allocation2] sm:$0xf] %vm1225, %v1223
        %v1227 = vld [vmem:[#allocation2] sm:$0xf]
        %v1228 = vld [vmem:[%s614] sm:$0xf]
        %v1229 = vld [vmem:[%s614 + $0x4] sm:$0xf]
        %v1230 = vld [vmem:[%s614 + $0x8] sm:$0xf]
        %v1231 = vld [vmem:[%s614 + $0xc] sm:$0xf]
        %v1232 = vld [vmem:[%s617] sm:$0x1]
        %v1234 = vlaneseq
        %v1235 = vshrl.u32 %v1234, 7
        %v1236 = vsub.s32 0, %v1235
        %v1237 = vrot.slane %v1232, %v1236
        %v1243 = vunpack.c.l.b16 %v1228
        %v1244 = vunpack.c.l.b16 %v1229
        %v1245 = vunpack.c.l.b16 %v1230
        %v1246 = vunpack.c.l.b16 %v1231
        %v1247 = vpack.c.b16 %v1244, %v1243
        %v1248 = vpack.c.b16 %v1246, %v1245
        %v1252 = vsel %vm651, %v1227, 0
        %1254 = vmatprep.subr.bf16.mxu0 0
        %1255 = vmatpush1.bf16.msra.mxu0 %v1247
        %1256 = vmatprep.subr.bf16.mxu0 0
        %1257 = vmatpush1.bf16.msra.mxu0 %v1248
        %1258 = vmatprep.subr.bf16.mxu0 0
        %1259 = vmatpush1.bf16.msra.mxu0 0
        %1260 = vmatprep.subr.bf16.mxu0 0
        %1261 = vmatpush1.bf16.msra.mxu0 0
        %1262 = vmatprep.subr.bf16.mxu0 0
        %1263 = vmatpush1.bf16.msra.mxu0 0
        %1264 = vmatprep.subr.bf16.mxu0 0
        %1265 = vmatpush1.bf16.msra.mxu0 0
        %1266 = vmatprep.subr.bf16.mxu0 0
        %1267 = vmatpush1.bf16.msra.mxu0 0
        %1268 = vmatprep.subr.bf16.mxu0 0
        %1269 = vmatpush1.bf16.msra.mxu0 0
        %1270 = vmatprep.subr.bf16.mxu0 0
        %1271 = vmatpush1.bf16.msra.mxu0 0
        %1272 = vmatprep.subr.bf16.mxu0 0
        %1273 = vmatpush1.bf16.msra.mxu0 0
        %1274 = vmatprep.subr.bf16.mxu0 0
        %1275 = vmatpush1.bf16.msra.mxu0 0
        %1276 = vmatprep.subr.bf16.mxu0 0
        %1277 = vmatpush1.bf16.msra.mxu0 0
        %1278 = vmatprep.subr.bf16.mxu0 0
        %1279 = vmatpush1.bf16.msra.mxu0 0
        %1280 = vmatprep.subr.bf16.mxu0 0
        %1281 = vmatpush1.bf16.msra.mxu0 0
        %1282 = vmatprep.subr.bf16.mxu0 0
        %1283 = vmatpush1.bf16.msra.mxu0 0
        %1284 = vmatprep.subr.bf16.mxu0 0
        %1285 = vmatpush1.bf16.msra.mxu0 0
        %1286 = vmatprep.mubr.bf16.mxu0 0
        %1287 = vmatmul.mubr.bf16.gmra.mrb[0].mxu0 %v1252
        %v1288 = vpop.f32.mrb[0].mxu0
        %v1289 = vadd.f32 %v1237, %v1288
        %v1290 = vpop.f32.mrb[0].mxu0
        %v1291 = vpop.f32.mrb[0].mxu0
        %v1292 = vpop.f32.mrb[0].mxu0
        %1293 = vdwg.mxu0
        %v1294 = vadd.f32 %v648, %v1289
        %1295 = vst.msk [vmem:[%s591] sm:$0xff] %vm651, %v1294
        %v1296 = vld [vmem:[%s620] sm:$0x1]
        %v1297 = vld [vmem:[%s623] sm:$0x1]
        %v1298 = vsel %vm651, %v1294, 0.0
        %1299 = vadd.xlane.f32.xlu0 %v1298
        %v1300 = vpop.xlane.xlu0 %1299
        %v1301 = vmul.f32 %v1300, %v655
        %v1302 = vsub.f32 %v1294, %v1301
        %v1303 = vmul.f32 %v1302, %v1302
        %v1304 = vsel %vm651, %v1303, 0.0
        %1305 = vadd.xlane.f32.xlu0 %v1304
        %v1306 = vpop.xlane.xlu0 %1305
        %v1307 = vmul.f32 %v1306, %v655
        %v1308 = vadd.f32 %v1307, 1e-05
        %v1309 = vrsqrt.pop %v1308
        %v1310 = vmul.f32 %v1302, %v1309
        %v1312 = vlaneseq
        %v1313 = vshrl.u32 %v1312, 7
        %v1314 = vsub.s32 0, %v1313
        %v1315 = vrot.slane %v1296, %v1314
        %v1317 = vmul.f32 %v1310, %v1315
        %v1319 = vlaneseq
        %v1320 = vshrl.u32 %v1319, 7
        %v1321 = vsub.s32 0, %v1320
        %v1322 = vrot.slane %v1297, %v1321
        %v1324 = vadd.f32 %v1317, %v1322
        %v1325 = vpack.c.bf16 %v1324, %v1324
        %v1326 = vld [vmem:[%s628] sm:$0xf]
        %v1327 = vld [vmem:[%s628 + $0x4] sm:$0xf]
        %v1328 = vld [vmem:[%s628 + $0x8] sm:$0xf]
        %v1329 = vld [vmem:[%s628 + $0xc] sm:$0xf]
        %v1330 = vld [vmem:[%s631] sm:$0x1]
        %v1331 = vld [vmem:[%s636] sm:$0xf]
        %v1332 = vld [vmem:[%s636 + $0x4] sm:$0xf]
        %v1333 = vld [vmem:[%s636 + $0x8] sm:$0xf]
        %v1334 = vld [vmem:[%s636 + $0xc] sm:$0xf]
        %v1335 = vld [vmem:[%s636 + $0x10] sm:$0xf]
        %v1336 = vld [vmem:[%s636 + $0x14] sm:$0xf]
        %v1337 = vld [vmem:[%s636 + $0x18] sm:$0xf]
        %v1338 = vld [vmem:[%s636 + $0x1c] sm:$0xf]
        %v1339 = vld [vmem:[%s636 + $0x20] sm:$0xf]
        %v1340 = vld [vmem:[%s636 + $0x24] sm:$0xf]
        %v1341 = vld [vmem:[%s636 + $0x28] sm:$0xf]
        %v1342 = vld [vmem:[%s636 + $0x2c] sm:$0xf]
        %v1343 = vld [vmem:[%s636 + $0x30] sm:$0xf]
        %v1344 = vld [vmem:[%s636 + $0x34] sm:$0xf]
        %v1345 = vld [vmem:[%s636 + $0x38] sm:$0xf]
        %v1346 = vld [vmem:[%s636 + $0x3c] sm:$0xf]
        %v1348 = vlaneseq
        %v1349 = vshrl.u32 %v1348, 7
        %v1350 = vsub.s32 0, %v1349
        %v1351 = vrot.slane %v1330, %v1350
        %v1357 = vunpack.c.l.b16 %v1326
        %v1358 = vunpack.c.l.b16 %v1327
        %v1359 = vunpack.c.l.b16 %v1328
        %v1360 = vunpack.c.l.b16 %v1329
        %v1361 = vpack.c.b16 %v1358, %v1357
        %v1362 = vpack.c.b16 %v1360, %v1359
        %v1366 = vsel %vm651, %v1325, 0
        %1368 = vmatprep.subr.bf16.mxu0 0
        %1369 = vmatpush1.bf16.msra.mxu0 %v1361
        %1370 = vmatprep.subr.bf16.mxu0 0
        %1371 = vmatpush1.bf16.msra.mxu0 %v1362
        %1372 = vmatprep.subr.bf16.mxu0 0
        %1373 = vmatpush1.bf16.msra.mxu0 0
        %1374 = vmatprep.subr.bf16.mxu0 0
        %1375 = vmatpush1.bf16.msra.mxu0 0
        %1376 = vmatprep.subr.bf16.mxu0 0
        %1377 = vmatpush1.bf16.msra.mxu0 0
        %1378 = vmatprep.subr.bf16.mxu0 0
        %1379 = vmatpush1.bf16.msra.mxu0 0
        %1380 = vmatprep.subr.bf16.mxu0 0
        %1381 = vmatpush1.bf16.msra.mxu0 0
        %1382 = vmatprep.subr.bf16.mxu0 0
        %1383 = vmatpush1.bf16.msra.mxu0 0
        %1384 = vmatprep.subr.bf16.mxu0 0
        %1385 = vmatpush1.bf16.msra.mxu0 0
        %1386 = vmatprep.subr.bf16.mxu0 0
        %1387 = vmatpush1.bf16.msra.mxu0 0
        %1388 = vmatprep.subr.bf16.mxu0 0
        %1389 = vmatpush1.bf16.msra.mxu0 0
        %1390 = vmatprep.subr.bf16.mxu0 0
        %1391 = vmatpush1.bf16.msra.mxu0 0
        %1392 = vmatprep.subr.bf16.mxu0 0
        %1393 = vmatpush1.bf16.msra.mxu0 0
        %1394 = vmatprep.subr.bf16.mxu0 0
        %1395 = vmatpush1.bf16.msra.mxu0 0
        %1396 = vmatprep.subr.bf16.mxu0 0
        %1397 = vmatpush1.bf16.msra.mxu0 0
        %1398 = vmatprep.subr.bf16.mxu0 0
        %1399 = vmatpush1.bf16.msra.mxu0 0
        %1400 = vmatprep.mubr.bf16.mxu0 0
        %1401 = vmatmul.mubr.bf16.gmra.mrb[0].mxu0 %v1366
        %v1402 = vpop.f32.mrb[0].mxu0
        %v1403 = vadd.f32 %v1351, %v1402
        %v1404 = vpop.f32.mrb[0].mxu0
        %v1405 = vpop.f32.mrb[0].mxu0
        %v1406 = vpop.f32.mrb[0].mxu0
        %1407 = vdwg.mxu0
        %v1408 = vmul.f32 %v1403, 1.702
        %v1409 = vxor.u32 %v1408, 2147483648
        %v1410 = vmul.f32 %v1409, 1.442695
        %v1411 = vpow.pop %v1410
        %v1412 = vadd.f32 %v1411, 1.0
        %v1413 = vrcp.pop %v1412
        %v1414 = vmul.f32 1.0, %v1413
        %v1415 = vmul.f32 %v1403, %v1414
        %v1416 = vpack.c.bf16 %v1415, %v1415
        %v1433 = vunpack.c.l.b16 %v1331
        %v1434 = vunpack.c.l.b16 %v1332
        %v1435 = vunpack.c.l.b16 %v1333
        %v1436 = vunpack.c.l.b16 %v1334
        %v1437 = vunpack.c.l.b16 %v1335
        %v1438 = vunpack.c.l.b16 %v1336
        %v1439 = vunpack.c.l.b16 %v1337
        %v1440 = vunpack.c.l.b16 %v1338
        %v1441 = vunpack.c.l.b16 %v1339
        %v1442 = vunpack.c.l.b16 %v1340
        %v1443 = vunpack.c.l.b16 %v1341
        %v1444 = vunpack.c.l.b16 %v1342
        %v1445 = vunpack.c.l.b16 %v1343
        %v1446 = vunpack.c.l.b16 %v1344
        %v1447 = vunpack.c.l.b16 %v1345
        %v1448 = vunpack.c.l.b16 %v1346
        %v1449 = vpack.c.b16 %v1434, %v1433
        %v1450 = vpack.c.b16 %v1436, %v1435
        %v1451 = vpack.c.b16 %v1438, %v1437
        %v1452 = vpack.c.b16 %v1440, %v1439
        %v1453 = vpack.c.b16 %v1442, %v1441
        %v1454 = vpack.c.b16 %v1444, %v1443
        %v1455 = vpack.c.b16 %v1446, %v1445
        %v1456 = vpack.c.b16 %v1448, %v1447
        %1465 = vmatprep.subr.bf16.mxu0 0
        %1466 = vmatpush1.bf16.msra.mxu0 %v1449
        %1467 = vmatprep.subr.bf16.mxu0 0
        %1468 = vmatpush1.bf16.msra.mxu0 %v1450
        %1469 = vmatprep.subr.bf16.mxu0 0
        %1470 = vmatpush1.bf16.msra.mxu0 %v1451
        %1471 = vmatprep.subr.bf16.mxu0 0
        %1472 = vmatpush1.bf16.msra.mxu0 %v1452
        %1473 = vmatprep.subr.bf16.mxu0 0
        %1474 = vmatpush1.bf16.msra.mxu0 %v1453
        %1475 = vmatprep.subr.bf16.mxu0 0
        %1476 = vmatpush1.bf16.msra.mxu0 %v1454
        %1477 = vmatprep.subr.bf16.mxu0 0
        %1478 = vmatpush1.bf16.msra.mxu0 %v1455
        %1479 = vmatprep.subr.bf16.mxu0 0
        %1480 = vmatpush1.bf16.msra.mxu0 %v1456
        %1481 = vmatprep.subr.bf16.mxu0 0
        %1482 = vmatpush1.bf16.msra.mxu0 0
        %1483 = vmatprep.subr.bf16.mxu0 0
        %1484 = vmatpush1.bf16.msra.mxu0 0
        %1485 = vmatprep.subr.bf16.mxu0 0
        %1486 = vmatpush1.bf16.msra.mxu0 0
        %1487 = vmatprep.subr.bf16.mxu0 0
        %1488 = vmatpush1.bf16.msra.mxu0 0
        %1489 = vmatprep.subr.bf16.mxu0 0
        %1490 = vmatpush1.bf16.msra.mxu0 0
        %1491 = vmatprep.subr.bf16.mxu0 0
        %1492 = vmatpush1.bf16.msra.mxu0 0
        %1493 = vmatprep.subr.bf16.mxu0 0
        %1494 = vmatpush1.bf16.msra.mxu0 0
        %1495 = vmatprep.subr.bf16.mxu0 0
        %1496 = vmatpush1.bf16.msra.mxu0 0
        %1497 = vmatprep.mubr.bf16.mxu0 0
        %1498 = vmatmul.mubr.bf16.gmra.mrb[0].mxu0 %v1416
        %v1499 = vpop.f32.mrb[0].mxu0
        %v1500 = vadd.f32 0.0, %v1499
        %v1501 = vpop.f32.mrb[0].mxu0
        %v1502 = vpop.f32.mrb[0].mxu0
        %v1503 = vpop.f32.mrb[0].mxu0
        %1504 = vdwg.mxu0
        %v1505 = vadd.f32 %v1294, %v1500
        %v1506 = vld [vmem:[%s639] sm:$0x1]
        %v1508 = vlaneseq
        %v1509 = vshrl.u32 %v1508, 7
        %v1510 = vsub.s32 0, %v1509
        %v1511 = vrot.slane %v1506, %v1510
        %v1513 = vadd.f32 %v1505, %v1511
        %1514 = vst.msk [vmem:[%s591] sm:$0xff] %vm651, %v1513
        %s1515 = sand.u32 %s385, 1
        %s1516 = scalar_lea.sflag [#allocation4], %s1515
        %s1517 = sand.u32 %s385, 1
        %s1518 = smul.addr %s1517, 8
        %s1519 = scalar_lea.vmem [#allocation3], %s1518
        // Predicated region
        $region77: #{tpu_custom_call.1} parent=71 // pred_check
          %p1520 = pneg %p395
        $region78: #{tpu_custom_call.1} parent=71 // pred_check_branch
          %1522 = sbr.rel (%p1520) target = $region80
        $region79: #{tpu_custom_call.1} parent=71 // pred_region
          %s1524 = ssub.s32 128, 128
          %1525 = vsyncadd %s1516, %s1524
          %s1526 = smul.addr %s31, 128
          %s1527 = scalar_lea.hbm %s13, %s1526
          %s1529 = sshll.u32 %s1519, 4
          %s1530 = int_to_ptr.vmem [resolvable:$true] %s1529
          %1532 = dma.vmem_to_hbm [thread:$0]  %s1530, 128, %s1527, %s1516
        $region80: #{tpu_custom_call.1} parent=71 // pred_fallthru
          _
      $region72: #{tpu_custom_call.1} parent=5 // pred_fallthru
        _
      %p1533 = scmp.le.s32.totalorder 2, %s22
      // Predicated region
      $region81: #{tpu_custom_call.1} parent=5 // pred_check
        %p1534 = pneg %p1533
      $region82: #{tpu_custom_call.1} parent=5 // pred_check_branch
        %1536 = sbr.rel (%p1534) target = $region84
      $region83: #{tpu_custom_call.1} parent=5 // pred_region
        %s1537 = ssub.s32 %s22, 2
        // Predicated region
        $region85: #{tpu_custom_call.1} parent=83 // pred_check
          %p1538 = pneg %p401
        $region86: #{tpu_custom_call.1} parent=83 // pred_check_branch
          %1540 = sbr.rel (%p1538) target = $region88
        $region87: #{tpu_custom_call.1} parent=83 // pred_region
          %s1541 = sand.u32 %s386, 1
          %s1542 = scalar_lea.sflag [#allocation4], %s1541
          %s1543 = sand.u32 %s386, 1
          %s1544 = smul.addr %s1543, 8
          %s1545 = scalar_lea.vmem [#allocation3], %s1544
          %1546 = dma.done %s1542, 128
        $region88: #{tpu_custom_call.1} parent=83 // pred_fallthru
          _
      $region84: #{tpu_custom_call.1} parent=5 // pred_fallthru
        _
    $region6: #{tpu_custom_call.1} parent=1 // loop_footer
      %s26 = sadd.s32 1, %s22
    $region7: #{tpu_custom_call.1} parent=1 // loop_footer_branch
      %21 = sbr.rel target = $region3
    $region8: #{tpu_custom_call.1} parent=1 // loop_exit
      _
    %1547 = vsyncpa [#allocation4], 1
    %s1548 = scalar_lea.sflag [#allocation4], 1
    %1549 = vsyncpa %s1548, 1

</llo_original>
